<compile_context>
chip_gen: v5e
topology: v5e:2x2
jax: 0.10.0
libtpu: 0.0.40
codegen_flags: <defaults>
</compile_context>

<pallas_src>
import functools

import numpy as np

import jax
import jax.numpy as jnp
from jax.experimental import pallas as pl
from jax.experimental.pallas import tpu as pltpu


def _round_up(x, m):
    return ((x + m - 1) // m) * m


_SQRT_2_OVER_PI = 0.7978845608028654


def _gelu_tanh(x):
    # nn.GELU(approximate='tanh'):
    #   0.5 * x * (1 + tanh(sqrt(2/pi) * (x + 0.044715 * x^3)))
    # Kept strictly in f32 (no bf16 VPU/EUP on v5e).
    return 0.5 * x * (1.0 + jnp.tanh(_SQRT_2_OVER_PI * (x + 0.044715 * x * x * x)))


def _decoder_kernel(*refs, num_layers):
    """Fused decoder body.

    refs = (z_ref, w_0..w_{L-1}, b_0..b_{L-1}, o_ref).
    Weights: (in_pad_l, out_pad_l) bf16; biases: (1, out_pad_l) f32.
    The activation is a register-resident value (no VMEM scratch); matmuls run
    on the MXU in bf16 with f32 accumulation; bias + GELU run in f32.
    Zero padding is exact: pad weight rows/cols and biases are 0, GELU(0)=0,
    and pad rows/cols are sliced off outside the kernel.
    """
    z_ref = refs[0]
    w_refs = refs[1:1 + num_layers]
    b_refs = refs[1 + num_layers:1 + 2 * num_layers]
    o_ref = refs[1 + 2 * num_layers]

    h = z_ref[...].astype(jnp.float32)
    for l in range(num_layers):            # static unroll: L is tiny & known
        y = jnp.dot(h.astype(jnp.bfloat16), w_refs[l][...],
                    preferred_element_type=jnp.float32)
        y = y + b_refs[l][...]
        if l < num_layers - 1:
            y = _gelu_tanh(y)
        h = y
    o_ref[...] = h.astype(o_ref.dtype)


def pack_decoder_params(params, weight_dtype=jnp.bfloat16):
    """One-time host-side packing (hoisted out of the per-call path).

    Each layer keeps its OWN padded shape (round_up(in,128), round_up(out,128))
    instead of a global max(dims)^2 stack.  Weights are stored bf16
    (MXU-native on v5e/v6e/v7x, halves weight HBM traffic); biases stay f32.
    Weights are (in_dim, out_dim) = torch nn.Linear weight.T; bias is (out_dim,).
    """
    dims = [params[0][0].shape[0]] + [w.shape[1] for w, _ in params]
    dims_pad = tuple(_round_up(d, 128) for d in dims)
    weights, biases = [], []
    for l, (w, b) in enumerate(params):
        in_dim, out_dim = w.shape
        w_np = np.zeros((dims_pad[l], dims_pad[l + 1]), np.float32)
        w_np[:in_dim, :out_dim] = np.asarray(w, np.float32)
        b_np = np.zeros((1, dims_pad[l + 1]), np.float32)
        b_np[0, :out_dim] = np.asarray(b, np.float32)
        weights.append(jnp.asarray(w_np, weight_dtype))
        biases.append(jnp.asarray(b_np, jnp.float32))
    # TODO(synk): on v7x, evaluate fp8 weights + per-layer scales for another
    # 2x reduction in weight bytes (v7x MXU is fp8-native, no int8).
    return dict(weights=tuple(weights), biases=tuple(biases),
                dims=tuple(dims), dims_pad=dims_pad)


def _pick_batch_tile(batch, block_batch, sublane=8):
    """Sublane-aligned batch tile; aim for >=2 grid steps so the batch axis
    actually pipelines and shards across v7x's two TensorCores.
    (z / output blocks are f32 -> 8-row sublanes; use 16 if they become bf16.)
    """
    batch_r = _round_up(batch, sublane)
    if batch_r > block_batch:
        return block_batch
    if batch_r >= 2 * sublane:
        return _round_up(pl.cdiv(batch_r, 2), sublane)
    return batch_r


def decoder_forward(z, packed, *, block_batch=256):
    """Fused decoder forward: ONE pallas_call for all Linear + GELU(tanh) layers.

    block_batch: batch rows per grid step.  256 matches the 256-wide v6e/v7x
    MXU and amortizes the ~0.35us per-step overhead; sweep 128 on v5e.
    """
    batch, in_dim = z.shape
    dims, dims_pad = packed["dims"], packed["dims_pad"]
    assert in_dim == dims[0], (in_dim, dims)
    num_layers = len(packed["weights"])
    out_dim = dims[-1]
    in_pad, out_pad = dims_pad[0], dims_pad[-1]

    tb = _pick_batch_tile(batch, block_batch, sublane=8)
    batch_pad = _round_up(batch, tb)

    if batch_pad == batch and in_pad == in_dim:
        z_pad = z                                     # already aligned: no copy
    else:
        z_pad = jnp.pad(z, ((0, batch_pad - batch), (0, in_pad - in_dim)))

    args = (z_pad,) + packed["weights"] + packed["biases"]
    kernel = functools.partial(_decoder_kernel, num_layers=num_layers)

    flops = sum(2 * batch_pad * dims_pad[l] * dims_pad[l + 1]
                for l in range(num_layers))
    transcendentals = sum(batch_pad * dims_pad[l + 1]
                          for l in range(num_layers - 1))
    weight_bytes = int(sum(w.size * w.dtype.itemsize for w in packed["weights"])
                       + sum(b.size * b.dtype.itemsize for b in packed["biases"]))
    bytes_accessed = int(z_pad.size * z_pad.dtype.itemsize
                         + batch_pad * out_pad * jnp.dtype(z.dtype).itemsize
                         + weight_bytes)
    act_bytes = 2 * 4 * tb * (in_pad + out_pad)       # double-buffered in/out
    work_bytes = 4 * 4 * tb * max(dims_pad)           # in-flight activations

    def build(single_buffer_weights):
        # Weights/biases are grid-invariant (index_map always (0,0)); single
        # buffering avoids doubling their resident VMEM footprint (matters
        # most under v7x's 64 MiB VMEM).
        weight_pm = pl.Buffered(1) if single_buffer_weights else None
        in_specs = [pl.BlockSpec((tb, in_pad), lambda i: (i, 0))]
        for l in range(num_layers):
            in_specs.append(pl.BlockSpec(
                (dims_pad[l], dims_pad[l + 1]), lambda i: (0, 0),
                pipeline_mode=weight_pm))
        for l in range(num_layers):
            in_specs.append(pl.BlockSpec(
                (1, dims_pad[l + 1]), lambda i: (0, 0),
                pipeline_mode=weight_pm))

        vmem_needed = (weight_bytes * (1 if single_buffer_weights else 2)
                       + act_bytes + work_bytes)
        # Explicit VMEM budget: v7x has 64 MiB physical / 32 MiB default scoped.
        vmem_limit = int(min(max(2 * vmem_needed, 32 << 20), 64 << 20))

        return pl.pallas_call(
            kernel,
            out_shape=jax.ShapeDtypeStruct((batch_pad, out_pad), z.dtype),
            grid=(batch_pad // tb,),
            in_specs=in_specs,
            out_specs=pl.BlockSpec((tb, out_pad), lambda i: (i, 0)),
            compiler_params=pltpu.CompilerParams(
                dimension_semantics=("parallel",),   # batch rows independent
                vmem_limit_bytes=vmem_limit),
            cost_estimate=pl.CostEstimate(
                flops=flops, transcendentals=transcendentals,
                bytes_accessed=bytes_accessed),
        )

    try:
        out = build(single_buffer_weights=True)(*args)
    except Exception:
        # pl.Buffered(1) single-buffering not supported by this JAX build:
        # fall back to default (double-buffered) pipelining — still correct,
        # just 2x resident weight VMEM.
        out = build(single_buffer_weights=False)(*args)

    return out[:batch, :out_dim]


def init_decoder_params(key, bottleneck_dim, hidden_dims, output_dim,
                        dtype=jnp.float32):
    """Deterministic synthetic params matching nn.Linear shapes.

    Weights are stored as (in_dim, out_dim) = torch weight.T.
    """
    dims = [bottleneck_dim] + list(hidden_dims) + [output_dim]
    params = []
    for in_dim, out_dim in zip(dims[:-1], dims[1:]):
        key, wk, bk = jax.random.split(key, 3)
        bound = 1.0 / float(in_dim) ** 0.5   # torch default Linear init bound
        w = jax.random.uniform(wk, (in_dim, out_dim), dtype, -bound, bound)
        b = jax.random.uniform(bk, (out_dim,), dtype, -bound, bound)
        params.append((w, b))
    return params


def _reference_forward(z, params, mxu_dtype=None):
    """Pure-JAX reference.  If mxu_dtype is set, both matmul operands are cast
    to it (mirroring the kernel's bf16 MXU inputs) with f32 accumulation."""
    x = z.astype(jnp.float32)
    n = len(params)
    for i, (w, b) in enumerate(params):
        lhs, rhs = x, w.astype(jnp.float32)
        if mxu_dtype is not None:
            lhs, rhs = lhs.astype(mxu_dtype), rhs.astype(mxu_dtype)
        x = jnp.dot(lhs, rhs, preferred_element_type=jnp.float32) + b.astype(jnp.float32)
        if i < n - 1:
            x = _gelu_tanh(x)
    return x


if __name__ == "__main__":
    bottleneck_dim = 16
    hidden_dims = [32, 64]
    output_dim = 24
    batch = 16            # -> 2 grid steps over the batch axis

    key = jax.random.PRNGKey(0)
    key, zk = jax.random.split(key)
    z = jax.random.normal(zk, (batch, bottleneck_dim), dtype=jnp.float32)

    params = init_decoder_params(key, bottleneck_dim, hidden_dims, output_dim)
    packed = pack_decoder_params(params)      # one-time host-side packing

    out = decoder_forward(z, packed)
    out = jax.block_until_ready(out)
    assert out.shape == (batch, output_dim), out.shape

    # Tight check vs. a reference that mirrors the kernel's bf16 MXU inputs.
    ref_bf16 = _reference_forward(z, params, mxu_dtype=jnp.bfloat16)
    assert jnp.allclose(out, ref_bf16, atol=2e-3, rtol=2e-3), float(
        jnp.max(jnp.abs(out - ref_bf16)))

    # Loose check vs. the exact f32 PyTorch-equivalent reference (bf16 MXU
    # inputs drift slightly from pure f32).
    ref_f32 = _reference_forward(z, params)
    assert jnp.allclose(out, ref_f32, atol=2e-2, rtol=2e-2), float(
        jnp.max(jnp.abs(out - ref_f32)))

    print("KERNEL_OK")
</pallas_src>

<mosaic_0001>
module attributes {stable_mosaic.version = 11 : i64} {
  func.func @_decoder_kernel(%arg0: i32, %arg1: memref<8x128xf32, #tpu.memory_space<vmem>>, %arg2: memref<128x128xbf16, #tpu.memory_space<vmem>>, %arg3: memref<128x128xbf16, #tpu.memory_space<vmem>>, %arg4: memref<128x128xbf16, #tpu.memory_space<vmem>>, %arg5: memref<1x128xf32, #tpu.memory_space<vmem>>, %arg6: memref<1x128xf32, #tpu.memory_space<vmem>>, %arg7: memref<1x128xf32, #tpu.memory_space<vmem>>, %arg8: memref<8x128xf32, #tpu.memory_space<vmem>>) attributes {dimension_semantics = [#tpu.dimension_semantics<parallel>], iteration_bounds = array<i64: 2>, scalar_prefetch = 0 : i64, scratch_operands = 0 : i64, tpu.core_type = #tpu.core_type<tc>, window_params = [{transform_indices = @transform_0, window_bounds = array<i64: 8, 128>}, {pipeline_mode = #tpu.pipeline_mode<synchronous>, transform_indices = @transform_1, window_bounds = array<i64: 128, 128>}, {pipeline_mode = #tpu.pipeline_mode<synchronous>, transform_indices = @transform_2, window_bounds = array<i64: 128, 128>}, {pipeline_mode = #tpu.pipeline_mode<synchronous>, transform_indices = @transform_3, window_bounds = array<i64: 128, 128>}, {pipeline_mode = #tpu.pipeline_mode<synchronous>, transform_indices = @transform_4, window_bounds = array<i64: 1, 128>}, {pipeline_mode = #tpu.pipeline_mode<synchronous>, transform_indices = @transform_5, window_bounds = array<i64: 1, 128>}, {pipeline_mode = #tpu.pipeline_mode<synchronous>, transform_indices = @transform_6, window_bounds = array<i64: 1, 128>}, {transform_indices = @transform_7, window_bounds = array<i64: 8, 128>}]} {
    %c0 = arith.constant 0 : index
    %c0_0 = arith.constant 0 : index
    %0 = vector.load %arg1[%c0, %c0_0] : memref<8x128xf32, #tpu.memory_space<vmem>>, vector<8x128xf32>
    %1 = arith.truncf %0 : vector<8x128xf32> to vector<8x128xbf16>
    %c0_1 = arith.constant 0 : index
    %c0_2 = arith.constant 0 : index
    %2 = vector.load %arg2[%c0_1, %c0_2] : memref<128x128xbf16, #tpu.memory_space<vmem>>, vector<128x128xbf16>
    %cst = arith.constant dense<0.000000e+00> : vector<8x128xf32>
    %3 = tpu.matmul %1, %2, %cst {dimension_numbers = #tpu.dot_dimension_numbers<[1], [0], [0], [1], [0, 0, 1, 1], [], []>} : vector<8x128xbf16>, vector<128x128xbf16>, vector<8x128xf32> -> vector<8x128xf32>
    %c0_3 = arith.constant 0 : index
    %c0_4 = arith.constant 0 : index
    %4 = vector.load %arg5[%c0_3, %c0_4] : memref<1x128xf32, #tpu.memory_space<vmem>>, vector<1x128xf32>
    %5 = vector.broadcast %4 : vector<1x128xf32> to vector<8x128xf32>
    %6 = arith.addf %3, %5 : vector<8x128xf32>
    %cst_5 = arith.constant 5.000000e-01 : f32
    %7 = vector.broadcast %cst_5 : f32 to vector<8x128xf32>
    %8 = arith.mulf %7, %6 : vector<8x128xf32>
    %cst_6 = arith.constant 4.471500e-02 : f32
    %9 = vector.broadcast %cst_6 : f32 to vector<8x128xf32>
    %10 = arith.mulf %9, %6 : vector<8x128xf32>
    %11 = arith.mulf %10, %6 : vector<8x128xf32>
    %12 = arith.mulf %11, %6 : vector<8x128xf32>
    %13 = arith.addf %6, %12 : vector<8x128xf32>
    %cst_7 = arith.constant 0.797884583 : f32
    %14 = vector.broadcast %cst_7 : f32 to vector<8x128xf32>
    %15 = arith.mulf %14, %13 : vector<8x128xf32>
    %16 = math.tanh %15 : vector<8x128xf32>
    %cst_8 = arith.constant 1.000000e+00 : f32
    %17 = vector.broadcast %cst_8 : f32 to vector<8x128xf32>
    %18 = arith.addf %17, %16 : vector<8x128xf32>
    %19 = arith.mulf %8, %18 : vector<8x128xf32>
    %20 = arith.truncf %19 : vector<8x128xf32> to vector<8x128xbf16>
    %c0_9 = arith.constant 0 : index
    %c0_10 = arith.constant 0 : index
    %21 = vector.load %arg3[%c0_9, %c0_10] : memref<128x128xbf16, #tpu.memory_space<vmem>>, vector<128x128xbf16>
    %cst_11 = arith.constant dense<0.000000e+00> : vector<8x128xf32>
    %22 = tpu.matmul %20, %21, %cst_11 {dimension_numbers = #tpu.dot_dimension_numbers<[1], [0], [0], [1], [0, 0, 1, 1], [], []>} : vector<8x128xbf16>, vector<128x128xbf16>, vector<8x128xf32> -> vector<8x128xf32>
    %c0_12 = arith.constant 0 : index
    %c0_13 = arith.constant 0 : index
    %23 = vector.load %arg6[%c0_12, %c0_13] : memref<1x128xf32, #tpu.memory_space<vmem>>, vector<1x128xf32>
    %24 = vector.broadcast %23 : vector<1x128xf32> to vector<8x128xf32>
    %25 = arith.addf %22, %24 : vector<8x128xf32>
    %cst_14 = arith.constant 5.000000e-01 : f32
    %26 = vector.broadcast %cst_14 : f32 to vector<8x128xf32>
    %27 = arith.mulf %26, %25 : vector<8x128xf32>
    %cst_15 = arith.constant 4.471500e-02 : f32
    %28 = vector.broadcast %cst_15 : f32 to vector<8x128xf32>
    %29 = arith.mulf %28, %25 : vector<8x128xf32>
    %30 = arith.mulf %29, %25 : vector<8x128xf32>
    %31 = arith.mulf %30, %25 : vector<8x128xf32>
    %32 = arith.addf %25, %31 : vector<8x128xf32>
    %cst_16 = arith.constant 0.797884583 : f32
    %33 = vector.broadcast %cst_16 : f32 to vector<8x128xf32>
    %34 = arith.mulf %33, %32 : vector<8x128xf32>
    %35 = math.tanh %34 : vector<8x128xf32>
    %cst_17 = arith.constant 1.000000e+00 : f32
    %36 = vector.broadcast %cst_17 : f32 to vector<8x128xf32>
    %37 = arith.addf %36, %35 : vector<8x128xf32>
    %38 = arith.mulf %27, %37 : vector<8x128xf32>
    %39 = arith.truncf %38 : vector<8x128xf32> to vector<8x128xbf16>
    %c0_18 = arith.constant 0 : index
    %c0_19 = arith.constant 0 : index
    %40 = vector.load %arg4[%c0_18, %c0_19] : memref<128x128xbf16, #tpu.memory_space<vmem>>, vector<128x128xbf16>
    %cst_20 = arith.constant dense<0.000000e+00> : vector<8x128xf32>
    %41 = tpu.matmul %39, %40, %cst_20 {dimension_numbers = #tpu.dot_dimension_numbers<[1], [0], [0], [1], [0, 0, 1, 1], [], []>} : vector<8x128xbf16>, vector<128x128xbf16>, vector<8x128xf32> -> vector<8x128xf32>
    %c0_21 = arith.constant 0 : index
    %c0_22 = arith.constant 0 : index
    %42 = vector.load %arg7[%c0_21, %c0_22] : memref<1x128xf32, #tpu.memory_space<vmem>>, vector<1x128xf32>
    %43 = vector.broadcast %42 : vector<1x128xf32> to vector<8x128xf32>
    %44 = arith.addf %41, %43 : vector<8x128xf32>
    %c0_23 = arith.constant 0 : index
    %c0_24 = arith.constant 0 : index
    %45 = vector.load %arg8[%c0_23, %c0_24] : memref<8x128xf32, #tpu.memory_space<vmem>>, vector<8x128xf32>
    tpu.vector_store %arg8[%c0_23, %c0_24], %44 {strides = array<i32>} : memref<8x128xf32, #tpu.memory_space<vmem>>, vector<8x128xf32>,
    return
  }
  func.func @transform_0(%arg0: i32) -> (i32, i32) {
    %c0_i32 = arith.constant 0 : i32
    %c0_i32_0 = arith.constant 0 : i32
    return %arg0, %c0_i32 : i32, i32
  }
  func.func @transform_1(%arg0: i32) -> (i32, i32) {
    %c0_i32 = arith.constant 0 : i32
    %c0_i32_0 = arith.constant 0 : i32
    %c0_i32_1 = arith.constant 0 : i32
    return %c0_i32, %c0_i32_0 : i32, i32
  }
  func.func @transform_2(%arg0: i32) -> (i32, i32) {
    %c0_i32 = arith.constant 0 : i32
    %c0_i32_0 = arith.constant 0 : i32
    %c0_i32_1 = arith.constant 0 : i32
    return %c0_i32, %c0_i32_0 : i32, i32
  }
  func.func @transform_3(%arg0: i32) -> (i32, i32) {
    %c0_i32 = arith.constant 0 : i32
    %c0_i32_0 = arith.constant 0 : i32
    %c0_i32_1 = arith.constant 0 : i32
    return %c0_i32, %c0_i32_0 : i32, i32
  }
  func.func @transform_4(%arg0: i32) -> (i32, i32) {
    %c0_i32 = arith.constant 0 : i32
    %c0_i32_0 = arith.constant 0 : i32
    %c0_i32_1 = arith.constant 0 : i32
    return %c0_i32, %c0_i32_0 : i32, i32
  }
  func.func @transform_5(%arg0: i32) -> (i32, i32) {
    %c0_i32 = arith.constant 0 : i32
    %c0_i32_0 = arith.constant 0 : i32
    %c0_i32_1 = arith.constant 0 : i32
    return %c0_i32, %c0_i32_0 : i32, i32
  }
  func.func @transform_6(%arg0: i32) -> (i32, i32) {
    %c0_i32 = arith.constant 0 : i32
    %c0_i32_0 = arith.constant 0 : i32
    %c0_i32_1 = arith.constant 0 : i32
    return %c0_i32, %c0_i32_0 : i32, i32
  }
  func.func @transform_7(%arg0: i32) -> (i32, i32) {
    %c0_i32 = arith.constant 0 : i32
    %c0_i32_0 = arith.constant 0 : i32
    return %arg0, %c0_i32 : i32, i32
  }
}

module attributes {stable_mosaic.version = 11 : i64} {
  func.func @_decoder_kernel(%arg0: i32, %arg1: memref<8x128xf32, #tpu.memory_space<vmem>>, %arg2: memref<128x128xbf16, #tpu.memory_space<vmem>>, %arg3: memref<128x128xbf16, #tpu.memory_space<vmem>>, %arg4: memref<128x128xbf16, #tpu.memory_space<vmem>>, %arg5: memref<1x128xf32, #tpu.memory_space<vmem>>, %arg6: memref<1x128xf32, #tpu.memory_space<vmem>>, %arg7: memref<1x128xf32, #tpu.memory_space<vmem>>, %arg8: memref<8x128xf32, #tpu.memory_space<vmem>>) attributes {dimension_semantics = [#tpu.dimension_semantics<parallel>], iteration_bounds = array<i64: 2>, scalar_prefetch = 0 : i64, scratch_operands = 0 : i64, tpu.core_type = #tpu.core_type<tc>, window_params = [{transform_indices = @transform_0, window_bounds = array<i64: 8, 128>}, {pipeline_mode = #tpu.pipeline_mode<synchronous>, transform_indices = @transform_1, window_bounds = array<i64: 128, 128>}, {pipeline_mode = #tpu.pipeline_mode<synchronous>, transform_indices = @transform_2, window_bounds = array<i64: 128, 128>}, {pipeline_mode = #tpu.pipeline_mode<synchronous>, transform_indices = @transform_3, window_bounds = array<i64: 128, 128>}, {pipeline_mode = #tpu.pipeline_mode<synchronous>, transform_indices = @transform_4, window_bounds = array<i64: 1, 128>}, {pipeline_mode = #tpu.pipeline_mode<synchronous>, transform_indices = @transform_5, window_bounds = array<i64: 1, 128>}, {pipeline_mode = #tpu.pipeline_mode<synchronous>, transform_indices = @transform_6, window_bounds = array<i64: 1, 128>}, {transform_indices = @transform_7, window_bounds = array<i64: 8, 128>}]} {
    %c0 = arith.constant 0 : index
    %c0_0 = arith.constant 0 : index
    %0 = vector.load %arg1[%c0, %c0_0] : memref<8x128xf32, #tpu.memory_space<vmem>>, vector<8x128xf32>
    %1 = arith.truncf %0 : vector<8x128xf32> to vector<8x128xbf16>
    %c0_1 = arith.constant 0 : index
    %c0_2 = arith.constant 0 : index
    %2 = vector.load %arg2[%c0_1, %c0_2] : memref<128x128xbf16, #tpu.memory_space<vmem>>, vector<128x128xbf16>
    %cst = arith.constant dense<0.000000e+00> : vector<8x128xf32>
    %3 = tpu.matmul %1, %2, %cst {dimension_numbers = #tpu.dot_dimension_numbers<[1], [0], [0], [1], [0, 0, 1, 1], [], []>} : vector<8x128xbf16>, vector<128x128xbf16>, vector<8x128xf32> -> vector<8x128xf32>
    %c0_3 = arith.constant 0 : index
    %c0_4 = arith.constant 0 : index
    %4 = vector.load %arg5[%c0_3, %c0_4] : memref<1x128xf32, #tpu.memory_space<vmem>>, vector<1x128xf32>
    %5 = vector.broadcast %4 : vector<1x128xf32> to vector<8x128xf32>
    %6 = arith.addf %3, %5 : vector<8x128xf32>
    %cst_5 = arith.constant 5.000000e-01 : f32
    %7 = vector.broadcast %cst_5 : f32 to vector<8x128xf32>
    %8 = arith.mulf %7, %6 : vector<8x128xf32>
    %cst_6 = arith.constant 4.471500e-02 : f32
    %9 = vector.broadcast %cst_6 : f32 to vector<8x128xf32>
    %10 = arith.mulf %9, %6 : vector<8x128xf32>
    %11 = arith.mulf %10, %6 : vector<8x128xf32>
    %12 = arith.mulf %11, %6 : vector<8x128xf32>
    %13 = arith.addf %6, %12 : vector<8x128xf32>
    %cst_7 = arith.constant 0.797884583 : f32
    %14 = vector.broadcast %cst_7 : f32 to vector<8x128xf32>
    %15 = arith.mulf %14, %13 : vector<8x128xf32>
    %16 = math.tanh %15 : vector<8x128xf32>
    %cst_8 = arith.constant 1.000000e+00 : f32
    %17 = vector.broadcast %cst_8 : f32 to vector<8x128xf32>
    %18 = arith.addf %17, %16 : vector<8x128xf32>
    %19 = arith.mulf %8, %18 : vector<8x128xf32>
    %20 = arith.truncf %19 : vector<8x128xf32> to vector<8x128xbf16>
    %c0_9 = arith.constant 0 : index
    %c0_10 = arith.constant 0 : index
    %21 = vector.load %arg3[%c0_9, %c0_10] : memref<128x128xbf16, #tpu.memory_space<vmem>>, vector<128x128xbf16>
    %cst_11 = arith.constant dense<0.000000e+00> : vector<8x128xf32>
    %22 = tpu.matmul %20, %21, %cst_11 {dimension_numbers = #tpu.dot_dimension_numbers<[1], [0], [0], [1], [0, 0, 1, 1], [], []>} : vector<8x128xbf16>, vector<128x128xbf16>, vector<8x128xf32> -> vector<8x128xf32>
    %c0_12 = arith.constant 0 : index
    %c0_13 = arith.constant 0 : index
    %23 = vector.load %arg6[%c0_12, %c0_13] : memref<1x128xf32, #tpu.memory_space<vmem>>, vector<1x128xf32>
    %24 = vector.broadcast %23 : vector<1x128xf32> to vector<8x128xf32>
    %25 = arith.addf %22, %24 : vector<8x128xf32>
    %cst_14 = arith.constant 5.000000e-01 : f32
    %26 = vector.broadcast %cst_14 : f32 to vector<8x128xf32>
    %27 = arith.mulf %26, %25 : vector<8x128xf32>
    %cst_15 = arith.constant 4.471500e-02 : f32
    %28 = vector.broadcast %cst_15 : f32 to vector<8x128xf32>
    %29 = arith.mulf %28, %25 : vector<8x128xf32>
    %30 = arith.mulf %29, %25 : vector<8x128xf32>
    %31 = arith.mulf %30, %25 : vector<8x128xf32>
    %32 = arith.addf %25, %31 : vector<8x128xf32>
    %cst_16 = arith.constant 0.797884583 : f32
    %33 = vector.broadcast %cst_16 : f32 to vector<8x128xf32>
    %34 = arith.mulf %33, %32 : vector<8x128xf32>
    %35 = math.tanh %34 : vector<8x128xf32>
    %cst_17 = arith.constant 1.000000e+00 : f32
    %36 = vector.broadcast %cst_17 : f32 to vector<8x128xf32>
    %37 = arith.addf %36, %35 : vector<8x128xf32>
    %38 = arith.mulf %27, %37 : vector<8x128xf32>
    %39 = arith.truncf %38 : vector<8x128xf32> to vector<8x128xbf16>
    %c0_18 = arith.constant 0 : index
    %c0_19 = arith.constant 0 : index
    %40 = vector.load %arg4[%c0_18, %c0_19] : memref<128x128xbf16, #tpu.memory_space<vmem>>, vector<128x128xbf16>
    %cst_20 = arith.constant dense<0.000000e+00> : vector<8x128xf32>
    %41 = tpu.matmul %39, %40, %cst_20 {dimension_numbers = #tpu.dot_dimension_numbers<[1], [0], [0], [1], [0, 0, 1, 1], [], []>} : vector<8x128xbf16>, vector<128x128xbf16>, vector<8x128xf32> -> vector<8x128xf32>
    %c0_21 = arith.constant 0 : index
    %c0_22 = arith.constant 0 : index
    %42 = vector.load %arg7[%c0_21, %c0_22] : memref<1x128xf32, #tpu.memory_space<vmem>>, vector<1x128xf32>
    %43 = vector.broadcast %42 : vector<1x128xf32> to vector<8x128xf32>
    %44 = arith.addf %41, %43 : vector<8x128xf32>
    %c0_23 = arith.constant 0 : index
    %c0_24 = arith.constant 0 : index
    %45 = vector.load %arg8[%c0_23, %c0_24] : memref<8x128xf32, #tpu.memory_space<vmem>>, vector<8x128xf32>
    tpu.vector_store %arg8[%c0_23, %c0_24], %44 {strides = array<i32>} : memref<8x128xf32, #tpu.memory_space<vmem>>, vector<8x128xf32>,
    return
  }
  func.func @transform_0(%arg0: i32) -> (i32, i32) {
    %c0_i32 = arith.constant 0 : i32
    %c0_i32_0 = arith.constant 0 : i32
    return %arg0, %c0_i32 : i32, i32
  }
  func.func @transform_1(%arg0: i32) -> (i32, i32) {
    %c0_i32 = arith.constant 0 : i32
    %c0_i32_0 = arith.constant 0 : i32
    %c0_i32_1 = arith.constant 0 : i32
    return %c0_i32, %c0_i32_0 : i32, i32
  }
  func.func @transform_2(%arg0: i32) -> (i32, i32) {
    %c0_i32 = arith.constant 0 : i32
    %c0_i32_0 = arith.constant 0 : i32
    %c0_i32_1 = arith.constant 0 : i32
    return %c0_i32, %c0_i32_0 : i32, i32
  }
  func.func @transform_3(%arg0: i32) -> (i32, i32) {
    %c0_i32 = arith.constant 0 : i32
    %c0_i32_0 = arith.constant 0 : i32
    %c0_i32_1 = arith.constant 0 : i32
    return %c0_i32, %c0_i32_0 : i32, i32
  }
  func.func @transform_4(%arg0: i32) -> (i32, i32) {
    %c0_i32 = arith.constant 0 : i32
    %c0_i32_0 = arith.constant 0 : i32
    %c0_i32_1 = arith.constant 0 : i32
    return %c0_i32, %c0_i32_0 : i32, i32
  }
  func.func @transform_5(%arg0: i32) -> (i32, i32) {
    %c0_i32 = arith.constant 0 : i32
    %c0_i32_0 = arith.constant 0 : i32
    %c0_i32_1 = arith.constant 0 : i32
    return %c0_i32, %c0_i32_0 : i32, i32
  }
  func.func @transform_6(%arg0: i32) -> (i32, i32) {
    %c0_i32 = arith.constant 0 : i32
    %c0_i32_0 = arith.constant 0 : i32
    %c0_i32_1 = arith.constant 0 : i32
    return %c0_i32, %c0_i32_0 : i32, i32
  }
  func.func @transform_7(%arg0: i32) -> (i32, i32) {
    %c0_i32 = arith.constant 0 : i32
    %c0_i32_0 = arith.constant 0 : i32
    return %arg0, %c0_i32 : i32, i32
  }
}

</mosaic_0001>

<llo_original>
// kernel: tpu_custom_call.1
$region0: #{tpu_custom_call.1}
  #allocation0 [shape = 'u32[]', space=smem, size = 0x4, offset = 0x4, fixed_abs, tag = 'smem constant byte address 0x4 - core index']
  #allocation1 [shape = 'u32[72,128]{1,0:T(1,128)}', space=vmem, size = 0x9000, scoped, tag = 'internal scratch']
  %s0 = inlined_call_operand.hbm [shape: f32[16,128], index: 0, kind: input, shape index: {}]
  %s1 = inlined_call_operand.hbm [shape: bf16[128,128], index: 1, kind: input, shape index: {}]
  %s2 = inlined_call_operand.hbm [shape: bf16[128,128], index: 2, kind: input, shape index: {}]
  %s3 = inlined_call_operand.hbm [shape: bf16[128,128], index: 3, kind: input, shape index: {}]
  %s4 = inlined_call_operand.vmem [shape: f32[1,128], index: 4, kind: input, shape index: {}]
  %s5 = inlined_call_operand.vmem [shape: f32[1,128], index: 5, kind: input, shape index: {}]
  %s6 = inlined_call_operand.vmem [shape: f32[1,128], index: 6, kind: input, shape index: {}]
  %s7 = inlined_call_operand.hbm [shape: f32[16,128], index: 7, kind: output, shape index: {}]
  %s8 = sld [smem:[#allocation0]]
  $region77: #{tpu_custom_call.1} parent=0
    _
  %s10 = ssub.s32 1, %s8
  %s11 = scalar_select 0, %s10, %s8
  $region1: #{tpu_custom_call.1} parent=0
    #allocation2 [shape = 'u8[8192]{0}', space=vmem, size = 0x2000, scoped, tag = 'input window, operand 0']
    #allocation3 [shape = 's32[2]{0}', space=sflag, size = 0x8, scoped, tag = 'scoped memory for tpu_custom_call.1']
    #allocation4 [shape = 's32[2]{0}', space=sflag, size = 0x8, scoped, tag = 'scoped memory for tpu_custom_call.1']
    #allocation5 [shape = 'u8[32768]{0}', space=vmem, size = 0x8000, scoped, tag = 'input window, operand 1, single buffered']
    #allocation6 [shape = 's32[1]{0}', space=sflag, size = 0x4, scoped, tag = 'scoped memory for tpu_custom_call.1']
    #allocation7 [shape = 'u8[32768]{0}', space=vmem, size = 0x8000, scoped, tag = 'input window, operand 2, single buffered']
    #allocation8 [shape = 'u8[32768]{0}', space=vmem, size = 0x8000, scoped, tag = 'input window, operand 3, single buffered']
    #allocation9 [shape = 's32[1]{0}', space=sflag, size = 0x4, scoped, tag = 'scoped memory for tpu_custom_call.1']
    #allocation10 [shape = 'u8[8192]{0}', space=vmem, size = 0x2000, scoped, tag = 'output window, operand 0']
    %12 = vsyncpa [#allocation3], 0
    %s13 = scalar_lea.sflag [#allocation3], 1
    %14 = vsyncpa %s13, 0
    %15 = vsyncpa [#allocation6], 0
    %16 = vsyncpa [#allocation9], 0
    %17 = vsyncpa [#allocation4], 0
    %s18 = scalar_lea.sflag [#allocation4], 1
    %19 = vsyncpa %s18, 0
    loop: start=0, step=1, limit=4
    $region2: #{tpu_custom_call.1} parent=1 // loop_pre_header
      _
    $region3: #{tpu_custom_call.1} parent=1 // loop_header
      %s21 = sphi 0, %s25
      %p22 = scmp.ge.s32.totalorder %s21, 4
      %s31 = sphi 0, %s33
      %s34 = sphi 0, %s31
      %s35 = sphi 0, %s34
      %s51 = sphi 0, %s35
      %s55 = sphi 0, %s55
      %s57 = sphi 0, %s55
      %s58 = sphi 0, %s57
      %s72 = sphi 0, %s58
      %s76 = sphi 0, %s76
      %s78 = sphi 0, %s76
      %s79 = sphi 0, %s78
      %s93 = sphi 0, %s79
      %s97 = sphi 0, %s97
      %s99 = sphi 0, %s97
      %s100 = sphi 0, %s99
      %s114 = sphi 0, %s100
      %s118 = sphi 0, %s118
      %s120 = sphi 0, %s118
      %s121 = sphi 0, %s120
      %s135 = sphi 0, %s121
      %s139 = sphi 0, %s139
      %s141 = sphi 0, %s139
      %s142 = sphi 0, %s141
      %s156 = sphi 0, %s142
      %s160 = sphi 0, %s160
      %s162 = sphi 0, %s160
      %s163 = sphi 0, %s162
      %s177 = sphi 0, %s163
      %s183 = sphi 0, %s185
      %s186 = sphi 0, %s183
      %s187 = sphi 0, %s186
      %s203 = sphi 0, %s187
    $region4: #{tpu_custom_call.1} parent=1 // loop_header_branch
      %24 = sbr.rel (%p22) target = $region8
    $region5: #{tpu_custom_call.1} parent=1 // loop_body
      %s26 = ssub.s32 %s21, 1
      %s27 = ssub.s32 %s21, 2
      %s28 = sadd.s32 %s21, 1
      %s29 = ssub.s32 %s21, %s28
      %p30 = scmp.eq.s32.totalorder %s29, 0
      %s32 = sadd.s32 %s31, 1
      %s33 = scalar_select %p30, %s31, %s32
      %p36 = pneg %p30
      %p37 = scmp.eq.s32.totalorder %s21, 1
      %p38 = por %p36, %p37
      %p39 = scmp.ne.s32.totalorder %s31, %s34
      %p40 = scmp.eq.s32.totalorder %s21, 0
      %p41 = por %p39, %p40
      %p42 = scmp.ne.s32.totalorder %s31, %s34
      %p43 = scmp.eq.s32.totalorder %s26, 1
      %p44 = por %p42, %p43
      %p45 = scmp.ne.s32.totalorder %s34, %s35
      %p46 = scmp.eq.s32.totalorder %s26, 0
      %p47 = por %p45, %p46
      %p48 = scmp.ne.s32.totalorder %s34, %s35
      %p49 = scmp.eq.s32.totalorder %s27, 1
      %p50 = por %p48, %p49
      %p52 = scmp.ne.s32.totalorder %s35, %s51
      %p53 = scmp.eq.s32.totalorder %s27, 0
      %p54 = por %p52, %p53
      %s56 = sadd.s32 %s55, 1
      %p59 = scmp.eq.s32.totalorder %s21, 1
      %p60 = scmp.ne.s32.totalorder %s55, %s57
      %p61 = scmp.eq.s32.totalorder %s21, 0
      %p62 = por %p60, %p61
      %p63 = scmp.ne.s32.totalorder %s55, %s57
      %p64 = scmp.eq.s32.totalorder %s26, 1
      %p65 = por %p63, %p64
      %p66 = scmp.ne.s32.totalorder %s57, %s58
      %p67 = scmp.eq.s32.totalorder %s26, 0
      %p68 = por %p66, %p67
      %p69 = scmp.ne.s32.totalorder %s57, %s58
      %p70 = scmp.eq.s32.totalorder %s27, 1
      %p71 = por %p69, %p70
      %p73 = scmp.ne.s32.totalorder %s58, %s72
      %p74 = scmp.eq.s32.totalorder %s27, 0
      %p75 = por %p73, %p74
      %s77 = sadd.s32 %s76, 1
      %p80 = scmp.eq.s32.totalorder %s21, 1
      %p81 = scmp.ne.s32.totalorder %s76, %s78
      %p82 = scmp.eq.s32.totalorder %s21, 0
      %p83 = por %p81, %p82
      %p84 = scmp.ne.s32.totalorder %s76, %s78
      %p85 = scmp.eq.s32.totalorder %s26, 1
      %p86 = por %p84, %p85
      %p87 = scmp.ne.s32.totalorder %s78, %s79
      %p88 = scmp.eq.s32.totalorder %s26, 0
      %p89 = por %p87, %p88
      %p90 = scmp.ne.s32.totalorder %s78, %s79
      %p91 = scmp.eq.s32.totalorder %s27, 1
      %p92 = por %p90, %p91
      %p94 = scmp.ne.s32.totalorder %s79, %s93
      %p95 = scmp.eq.s32.totalorder %s27, 0
      %p96 = por %p94, %p95
      %s98 = sadd.s32 %s97, 1
      %p101 = scmp.eq.s32.totalorder %s21, 1
      %p102 = scmp.ne.s32.totalorder %s97, %s99
      %p103 = scmp.eq.s32.totalorder %s21, 0
      %p104 = por %p102, %p103
      %p105 = scmp.ne.s32.totalorder %s97, %s99
      %p106 = scmp.eq.s32.totalorder %s26, 1
      %p107 = por %p105, %p106
      %p108 = scmp.ne.s32.totalorder %s99, %s100
      %p109 = scmp.eq.s32.totalorder %s26, 0
      %p110 = por %p108, %p109
      %p111 = scmp.ne.s32.totalorder %s99, %s100
      %p112 = scmp.eq.s32.totalorder %s27, 1
      %p113 = por %p111, %p112
      %p115 = scmp.ne.s32.totalorder %s100, %s114
      %p116 = scmp.eq.s32.totalorder %s27, 0
      %p117 = por %p115, %p116
      %s119 = sadd.s32 %s118, 1
      %p122 = scmp.eq.s32.totalorder %s21, 1
      %p123 = scmp.ne.s32.totalorder %s118, %s120
      %p124 = scmp.eq.s32.totalorder %s21, 0
      %p125 = por %p123, %p124
      %p126 = scmp.ne.s32.totalorder %s118, %s120
      %p127 = scmp.eq.s32.totalorder %s26, 1
      %p128 = por %p126, %p127
      %p129 = scmp.ne.s32.totalorder %s120, %s121
      %p130 = scmp.eq.s32.totalorder %s26, 0
      %p131 = por %p129, %p130
      %p132 = scmp.ne.s32.totalorder %s120, %s121
      %p133 = scmp.eq.s32.totalorder %s27, 1
      %p134 = por %p132, %p133
      %p136 = scmp.ne.s32.totalorder %s121, %s135
      %p137 = scmp.eq.s32.totalorder %s27, 0
      %p138 = por %p136, %p137
      %s140 = sadd.s32 %s139, 1
      %p143 = scmp.eq.s32.totalorder %s21, 1
      %p144 = scmp.ne.s32.totalorder %s139, %s141
      %p145 = scmp.eq.s32.totalorder %s21, 0
      %p146 = por %p144, %p145
      %p147 = scmp.ne.s32.totalorder %s139, %s141
      %p148 = scmp.eq.s32.totalorder %s26, 1
      %p149 = por %p147, %p148
      %p150 = scmp.ne.s32.totalorder %s141, %s142
      %p151 = scmp.eq.s32.totalorder %s26, 0
      %p152 = por %p150, %p151
      %p153 = scmp.ne.s32.totalorder %s141, %s142
      %p154 = scmp.eq.s32.totalorder %s27, 1
      %p155 = por %p153, %p154
      %p157 = scmp.ne.s32.totalorder %s142, %s156
      %p158 = scmp.eq.s32.totalorder %s27, 0
      %p159 = por %p157, %p158
      %s161 = sadd.s32 %s160, 1
      %p164 = scmp.eq.s32.totalorder %s21, 1
      %p165 = scmp.ne.s32.totalorder %s160, %s162
      %p166 = scmp.eq.s32.totalorder %s21, 0
      %p167 = por %p165, %p166
      %p168 = scmp.ne.s32.totalorder %s160, %s162
      %p169 = scmp.eq.s32.totalorder %s26, 1
      %p170 = por %p168, %p169
      %p171 = scmp.ne.s32.totalorder %s162, %s163
      %p172 = scmp.eq.s32.totalorder %s26, 0
      %p173 = por %p171, %p172
      %p174 = scmp.ne.s32.totalorder %s162, %s163
      %p175 = scmp.eq.s32.totalorder %s27, 1
      %p176 = por %p174, %p175
      %p178 = scmp.ne.s32.totalorder %s163, %s177
      %p179 = scmp.eq.s32.totalorder %s27, 0
      %p180 = por %p178, %p179
      %s181 = ssub.s32 %s21, %s28
      %p182 = scmp.eq.s32.totalorder %s181, 0
      %s184 = sadd.s32 %s183, 1
      %s185 = scalar_select %p182, %s183, %s184
      %p188 = pneg %p182
      %p189 = scmp.eq.s32.totalorder %s21, 1
      %p190 = por %p188, %p189
      %p191 = scmp.ne.s32.totalorder %s183, %s186
      %p192 = scmp.eq.s32.totalorder %s21, 0
      %p193 = por %p191, %p192
      %p194 = scmp.ne.s32.totalorder %s183, %s186
      %p195 = scmp.eq.s32.totalorder %s26, 1
      %p196 = por %p194, %p195
      %p197 = scmp.ne.s32.totalorder %s186, %s187
      %p198 = scmp.eq.s32.totalorder %s26, 0
      %p199 = por %p197, %p198
      %p200 = scmp.ne.s32.totalorder %s186, %s187
      %p201 = scmp.eq.s32.totalorder %s27, 1
      %p202 = por %p200, %p201
      %p204 = scmp.ne.s32.totalorder %s187, %s203
      %p205 = scmp.eq.s32.totalorder %s27, 0
      %p206 = por %p204, %p205
      %p207 = scmp.le.s32.totalorder 1, %s21
      %p208 = scmp.lt.s32.totalorder %s21, 3
      %p209 = pnand %p207, %p208
      %p210 = pneg %p209
      // Predicated region
      $region9: #{tpu_custom_call.1} parent=5 // pred_check
        _
      $region10: #{tpu_custom_call.1} parent=5 // pred_check_branch
        %212 = sbr.rel (%p209) target = $region12
      $region11: #{tpu_custom_call.1} parent=5 // pred_region
        %s213 = ssub.s32 %s21, 1
        // Predicated region
        $region13: #{tpu_custom_call.1} parent=11 // pred_check
          %p214 = pneg %p68
        $region14: #{tpu_custom_call.1} parent=11 // pred_check_branch
          %216 = sbr.rel (%p214) target = $region16
        $region15: #{tpu_custom_call.1} parent=11 // pred_region
          %218 = vsyncadd [#allocation6], 0
          %s219 = sshll.u32 %s1, 4
          %s220 = int_to_ptr.hbm [resolvable:$true] %s219
          %s221 = sshll.u32 [#allocation5], 4
          %s222 = int_to_ptr.vmem [resolvable:$true] %s221
          %227 = dma.hbm_to_vmem [thread:$0]  %s220, 1024, %s222, [#allocation6], 64, 64, 4
        $region16: #{tpu_custom_call.1} parent=11 // pred_fallthru
          _
        // Predicated region
        $region17: #{tpu_custom_call.1} parent=11 // pred_check
          %p228 = pneg %p89
        $region18: #{tpu_custom_call.1} parent=11 // pred_check_branch
          %230 = sbr.rel (%p228) target = $region20
        $region19: #{tpu_custom_call.1} parent=11 // pred_region
          %232 = vsyncadd [#allocation6], 0
          %s233 = sshll.u32 %s2, 4
          %s234 = int_to_ptr.hbm [resolvable:$true] %s233
          %s235 = sshll.u32 [#allocation7], 4
          %s236 = int_to_ptr.vmem [resolvable:$true] %s235
          %241 = dma.hbm_to_vmem [thread:$0]  %s234, 1024, %s236, [#allocation6], 64, 64, 4
        $region20: #{tpu_custom_call.1} parent=11 // pred_fallthru
          _
        // Predicated region
        $region21: #{tpu_custom_call.1} parent=11 // pred_check
          %p242 = pneg %p110
        $region22: #{tpu_custom_call.1} parent=11 // pred_check_branch
          %244 = sbr.rel (%p242) target = $region24
        $region23: #{tpu_custom_call.1} parent=11 // pred_region
          %246 = vsyncadd [#allocation9], 0
          %s247 = sshll.u32 %s3, 4
          %s248 = int_to_ptr.hbm [resolvable:$true] %s247
          %s249 = sshll.u32 [#allocation8], 4
          %s250 = int_to_ptr.vmem [resolvable:$true] %s249
          %255 = dma.hbm_to_vmem [thread:$0]  %s248, 1024, %s250, [#allocation9], 64, 64, 4
        $region24: #{tpu_custom_call.1} parent=11 // pred_fallthru
          _
        // Predicated region
        $region25: #{tpu_custom_call.1} parent=11 // pred_check
          %p256 = pneg %p131
        $region26: #{tpu_custom_call.1} parent=11 // pred_check_branch
          %258 = sbr.rel (%p256) target = $region28
        $region27: #{tpu_custom_call.1} parent=11 // pred_region
          _
        $region28: #{tpu_custom_call.1} parent=11 // pred_fallthru
          _
        // Predicated region
        $region29: #{tpu_custom_call.1} parent=11 // pred_check
          %p259 = pneg %p152
        $region30: #{tpu_custom_call.1} parent=11 // pred_check_branch
          %261 = sbr.rel (%p259) target = $region32
        $region31: #{tpu_custom_call.1} parent=11 // pred_region
          _
        $region32: #{tpu_custom_call.1} parent=11 // pred_fallthru
          _
        // Predicated region
        $region33: #{tpu_custom_call.1} parent=11 // pred_check
          %p262 = pneg %p173
        $region34: #{tpu_custom_call.1} parent=11 // pred_check_branch
          %264 = sbr.rel (%p262) target = $region36
        $region35: #{tpu_custom_call.1} parent=11 // pred_region
          _
        $region36: #{tpu_custom_call.1} parent=11 // pred_fallthru
          _
      $region12: #{tpu_custom_call.1} parent=5 // pred_fallthru
        _
      %p265 = scmp.lt.s32.totalorder %s21, 2
      // Predicated region
      $region37: #{tpu_custom_call.1} parent=5 // pred_check
        %p266 = pneg %p265
      $region38: #{tpu_custom_call.1} parent=5 // pred_check_branch
        %268 = sbr.rel (%p266) target = $region40
      $region39: #{tpu_custom_call.1} parent=5 // pred_region
        // Predicated region
        $region41: #{tpu_custom_call.1} parent=39 // pred_check
          %p269 = pneg %p41
        $region42: #{tpu_custom_call.1} parent=39 // pred_check_branch
          %271 = sbr.rel (%p269) target = $region44
        $region43: #{tpu_custom_call.1} parent=39 // pred_region
          %s272 = sand.u32 %s31, 1
          %s273 = scalar_lea.sflag [#allocation3], %s272
          %s274 = sand.u32 %s31, 1
          %s275 = smul.addr %s274, 8
          %s276 = scalar_lea.vmem [#allocation2], %s275
          %278 = vsyncadd %s273, 0
          %s279 = smul.addr %s21, 8
          %s280 = scalar_lea.hbm %s0, %s279
          %s282 = sshll.u32 %s280, 4
          %s283 = int_to_ptr.hbm [resolvable:$true] %s282
          %s284 = sshll.u32 %s276, 4
          %s285 = int_to_ptr.vmem [resolvable:$true] %s284
          %287 = dma.hbm_to_vmem [thread:$0]  %s283, 128, %s285, %s273
        $region44: #{tpu_custom_call.1} parent=39 // pred_fallthru
          _
      $region40: #{tpu_custom_call.1} parent=5 // pred_fallthru
        _
      %p288 = scmp.le.s32.totalorder 1, %s21
      %p289 = scmp.lt.s32.totalorder %s21, 3
      %p290 = pnand %p288, %p289
      %p291 = pneg %p290
      // Predicated region
      $region45: #{tpu_custom_call.1} parent=5 // pred_check
        _
      $region46: #{tpu_custom_call.1} parent=5 // pred_check_branch
        %293 = sbr.rel (%p290) target = $region48
      $region47: #{tpu_custom_call.1} parent=5 // pred_region
        %s294 = ssub.s32 %s21, 1
        %s295 = sand.u32 %s34, 1
        %s296 = scalar_lea.sflag [#allocation3], %s295
        %s297 = sand.u32 %s34, 1
        %s298 = smul.addr %s297, 8
        %s299 = scalar_lea.vmem [#allocation2], %s298
        // Predicated region
        $region49: #{tpu_custom_call.1} parent=47 // pred_check
          %p300 = pneg %p47
        $region50: #{tpu_custom_call.1} parent=47 // pred_check_branch
          %302 = sbr.rel (%p300) target = $region52
        $region51: #{tpu_custom_call.1} parent=47 // pred_region
          %304 = dma.done %s296, 128
        $region52: #{tpu_custom_call.1} parent=47 // pred_fallthru
          _
        // Predicated region
        $region53: #{tpu_custom_call.1} parent=47 // pred_check
          %p305 = pneg %p68
        $region54: #{tpu_custom_call.1} parent=47 // pred_check_branch
          %307 = sbr.rel (%p305) target = $region56
        $region55: #{tpu_custom_call.1} parent=47 // pred_region
          %309 = dma.done [#allocation6], 1024
        $region56: #{tpu_custom_call.1} parent=47 // pred_fallthru
          _
        // Predicated region
        $region57: #{tpu_custom_call.1} parent=47 // pred_check
          %p310 = pneg %p89
        $region58: #{tpu_custom_call.1} parent=47 // pred_check_branch
          %312 = sbr.rel (%p310) target = $region60
        $region59: #{tpu_custom_call.1} parent=47 // pred_region
          %314 = dma.done [#allocation6], 1024
        $region60: #{tpu_custom_call.1} parent=47 // pred_fallthru
          _
        // Predicated region
        $region61: #{tpu_custom_call.1} parent=47 // pred_check
          %p315 = pneg %p110
        $region62: #{tpu_custom_call.1} parent=47 // pred_check_branch
          %317 = sbr.rel (%p315) target = $region64
        $region63: #{tpu_custom_call.1} parent=47 // pred_region
          %319 = dma.done [#allocation9], 1024
        $region64: #{tpu_custom_call.1} parent=47 // pred_fallthru
          _
        %s320 = sand.u32 %s34, 1
        %s321 = scalar_lea.sflag [#allocation3], %s320
        %s322 = sand.u32 %s34, 1
        %s323 = smul.addr %s322, 8
        %s324 = scalar_lea.vmem [#allocation2], %s323
        %p325 = pneg %p47
        %p326 = pneg %p44
        %p327 = pneg %p68
        %p328 = pneg %p65
        %p329 = pneg %p89
        %p330 = pneg %p86
        %p331 = pneg %p110
        %p332 = pneg %p107
        %p333 = pneg %p131
        %p334 = pneg %p128
        %p335 = pneg %p152
        %p336 = pneg %p149
        %p337 = pneg %p173
        %p338 = pneg %p170
        %p339 = pneg %p199
        %p340 = pneg %p196
        %s341 = sand.u32 %s186, 1
        %s342 = scalar_lea.sflag [#allocation4], %s341
        %s343 = sand.u32 %s186, 1
        %s344 = smul.addr %s343, 8
        %s345 = scalar_lea.vmem [#allocation10], %s344
        %v346 = vld [vmem:[%s299] sm:$0xff]
        %v347 = vpack.c.bf16 %v346, %v346
        %v348 = vld [vmem:[#allocation5] sm:$0xf]
        %v349 = vld [vmem:[#allocation5 + $0x4] sm:$0xf]
        %v350 = vld [vmem:[#allocation5 + $0x8] sm:$0xf]
        %v351 = vld [vmem:[#allocation5 + $0xc] sm:$0xf]
        %v352 = vld [vmem:[#allocation5 + $0x10] sm:$0xf]
        %v353 = vld [vmem:[#allocation5 + $0x14] sm:$0xf]
        %v354 = vld [vmem:[#allocation5 + $0x18] sm:$0xf]
        %v355 = vld [vmem:[#allocation5 + $0x1c] sm:$0xf]
        %v356 = vld [vmem:[#allocation5 + $0x20] sm:$0xf]
        %v357 = vld [vmem:[#allocation5 + $0x24] sm:$0xf]
        %v358 = vld [vmem:[#allocation5 + $0x28] sm:$0xf]
        %v359 = vld [vmem:[#allocation5 + $0x2c] sm:$0xf]
        %v360 = vld [vmem:[#allocation5 + $0x30] sm:$0xf]
        %v361 = vld [vmem:[#allocation5 + $0x34] sm:$0xf]
        %v362 = vld [vmem:[#allocation5 + $0x38] sm:$0xf]
        %v363 = vld [vmem:[#allocation5 + $0x3c] sm:$0xf]
        %v364 = vld [vmem:[%s4] sm:$0x1]
        %v366 = vperm.slane %v364, 0
        %v384 = vunpack.c.l.b16 %v348
        %v385 = vunpack.c.l.b16 %v349
        %v386 = vunpack.c.l.b16 %v350
        %v387 = vunpack.c.l.b16 %v351
        %v388 = vunpack.c.l.b16 %v352
        %v389 = vunpack.c.l.b16 %v353
        %v390 = vunpack.c.l.b16 %v354
        %v391 = vunpack.c.l.b16 %v355
        %v392 = vunpack.c.l.b16 %v356
        %v393 = vunpack.c.l.b16 %v357
        %v394 = vunpack.c.l.b16 %v358
        %v395 = vunpack.c.l.b16 %v359
        %v396 = vunpack.c.l.b16 %v360
        %v397 = vunpack.c.l.b16 %v361
        %v398 = vunpack.c.l.b16 %v362
        %v399 = vunpack.c.l.b16 %v363
        %v400 = vpack.c.b16 %v385, %v384
        %v401 = vpack.c.b16 %v387, %v386
        %v402 = vpack.c.b16 %v389, %v388
        %v403 = vpack.c.b16 %v391, %v390
        %v404 = vpack.c.b16 %v393, %v392
        %v405 = vpack.c.b16 %v395, %v394
        %v406 = vpack.c.b16 %v397, %v396
        %v407 = vpack.c.b16 %v399, %v398
        %416 = vmatpush.bf16.msra.mxu0 %v407
        %417 = vmatpush.bf16.msra.mxu0 %v406
        %418 = vmatpush.bf16.msra.mxu0 %v405
        %419 = vmatpush.bf16.msra.mxu0 %v404
        %420 = vmatpush.bf16.msra.mxu0 %v403
        %421 = vmatpush.bf16.msra.mxu0 %v402
        %422 = vmatpush.bf16.msra.mxu0 %v401
        %423 = vmatpush.bf16.msra.mxu0 %v400
        %424 = vmatmul.bf16.gmra.mxu0 %v347
        %v425 = vpop.f32.mrf.mxu0
        %v426 = vadd.f32 %v366, %v425
        %v427 = vpop.f32.mrf.mxu0
        %428 = vdwg.mxu0
        %v429 = vmul.f32 %v426, 0.5
        %v430 = vmul.f32 %v426, 0.044715
        %v431 = vmul.f32 %v430, %v426
        %v432 = vmul.f32 %v431, %v426
        %v433 = vadd.f32 %v426, %v432
        %v434 = vmul.f32 %v433, 0.7978846
        %v435 = vtanh.pop %v434
        %v436 = vadd.f32 %v435, 1.0
        %v437 = vmul.f32 %v429, %v436
        %v438 = vpack.c.bf16 %v437, %v437
        %v439 = vld [vmem:[#allocation7] sm:$0xf]
        %v440 = vld [vmem:[#allocation7 + $0x4] sm:$0xf]
        %v441 = vld [vmem:[#allocation7 + $0x8] sm:$0xf]
        %v442 = vld [vmem:[#allocation7 + $0xc] sm:$0xf]
        %v443 = vld [vmem:[#allocation7 + $0x10] sm:$0xf]
        %v444 = vld [vmem:[#allocation7 + $0x14] sm:$0xf]
        %v445 = vld [vmem:[#allocation7 + $0x18] sm:$0xf]
        %v446 = vld [vmem:[#allocation7 + $0x1c] sm:$0xf]
        %v447 = vld [vmem:[#allocation7 + $0x20] sm:$0xf]
        %v448 = vld [vmem:[#allocation7 + $0x24] sm:$0xf]
        %v449 = vld [vmem:[#allocation7 + $0x28] sm:$0xf]
        %v450 = vld [vmem:[#allocation7 + $0x2c] sm:$0xf]
        %v451 = vld [vmem:[#allocation7 + $0x30] sm:$0xf]
        %v452 = vld [vmem:[#allocation7 + $0x34] sm:$0xf]
        %v453 = vld [vmem:[#allocation7 + $0x38] sm:$0xf]
        %v454 = vld [vmem:[#allocation7 + $0x3c] sm:$0xf]
        %v455 = vld [vmem:[%s5] sm:$0x1]
        %v457 = vperm.slane %v455, 0
        %v475 = vunpack.c.l.b16 %v439
        %v476 = vunpack.c.l.b16 %v440
        %v477 = vunpack.c.l.b16 %v441
        %v478 = vunpack.c.l.b16 %v442
        %v479 = vunpack.c.l.b16 %v443
        %v480 = vunpack.c.l.b16 %v444
        %v481 = vunpack.c.l.b16 %v445
        %v482 = vunpack.c.l.b16 %v446
        %v483 = vunpack.c.l.b16 %v447
        %v484 = vunpack.c.l.b16 %v448
        %v485 = vunpack.c.l.b16 %v449
        %v486 = vunpack.c.l.b16 %v450
        %v487 = vunpack.c.l.b16 %v451
        %v488 = vunpack.c.l.b16 %v452
        %v489 = vunpack.c.l.b16 %v453
        %v490 = vunpack.c.l.b16 %v454
        %v491 = vpack.c.b16 %v476, %v475
        %v492 = vpack.c.b16 %v478, %v477
        %v493 = vpack.c.b16 %v480, %v479
        %v494 = vpack.c.b16 %v482, %v481
        %v495 = vpack.c.b16 %v484, %v483
        %v496 = vpack.c.b16 %v486, %v485
        %v497 = vpack.c.b16 %v488, %v487
        %v498 = vpack.c.b16 %v490, %v489
        %507 = vmatpush.bf16.msra.mxu0 %v498
        %508 = vmatpush.bf16.msra.mxu0 %v497
        %509 = vmatpush.bf16.msra.mxu0 %v496
        %510 = vmatpush.bf16.msra.mxu0 %v495
        %511 = vmatpush.bf16.msra.mxu0 %v494
        %512 = vmatpush.bf16.msra.mxu0 %v493
        %513 = vmatpush.bf16.msra.mxu0 %v492
        %514 = vmatpush.bf16.msra.mxu0 %v491
        %515 = vmatmul.bf16.gmra.mxu0 %v438
        %v516 = vpop.f32.mrf.mxu0
        %v517 = vadd.f32 %v457, %v516
        %v518 = vpop.f32.mrf.mxu0
        %519 = vdwg.mxu0
        %v520 = vmul.f32 %v517, 0.5
        %v521 = vmul.f32 %v517, 0.044715
        %v522 = vmul.f32 %v521, %v517
        %v523 = vmul.f32 %v522, %v517
        %v524 = vadd.f32 %v517, %v523
        %v525 = vmul.f32 %v524, 0.7978846
        %v526 = vtanh.pop %v525
        %v527 = vadd.f32 %v526, 1.0
        %v528 = vmul.f32 %v520, %v527
        %v529 = vpack.c.bf16 %v528, %v528
        %v530 = vld [vmem:[#allocation8] sm:$0xf]
        %v531 = vld [vmem:[#allocation8 + $0x4] sm:$0xf]
        %v532 = vld [vmem:[#allocation8 + $0x8] sm:$0xf]
        %v533 = vld [vmem:[#allocation8 + $0xc] sm:$0xf]
        %v534 = vld [vmem:[#allocation8 + $0x10] sm:$0xf]
        %v535 = vld [vmem:[#allocation8 + $0x14] sm:$0xf]
        %v536 = vld [vmem:[#allocation8 + $0x18] sm:$0xf]
        %v537 = vld [vmem:[#allocation8 + $0x1c] sm:$0xf]
        %v538 = vld [vmem:[#allocation8 + $0x20] sm:$0xf]
        %v539 = vld [vmem:[#allocation8 + $0x24] sm:$0xf]
        %v540 = vld [vmem:[#allocation8 + $0x28] sm:$0xf]
        %v541 = vld [vmem:[#allocation8 + $0x2c] sm:$0xf]
        %v542 = vld [vmem:[#allocation8 + $0x30] sm:$0xf]
        %v543 = vld [vmem:[#allocation8 + $0x34] sm:$0xf]
        %v544 = vld [vmem:[#allocation8 + $0x38] sm:$0xf]
        %v545 = vld [vmem:[#allocation8 + $0x3c] sm:$0xf]
        %v546 = vld [vmem:[%s6] sm:$0x1]
        %v548 = vperm.slane %v546, 0
        %v566 = vunpack.c.l.b16 %v530
        %v567 = vunpack.c.l.b16 %v531
        %v568 = vunpack.c.l.b16 %v532
        %v569 = vunpack.c.l.b16 %v533
        %v570 = vunpack.c.l.b16 %v534
        %v571 = vunpack.c.l.b16 %v535
        %v572 = vunpack.c.l.b16 %v536
        %v573 = vunpack.c.l.b16 %v537
        %v574 = vunpack.c.l.b16 %v538
        %v575 = vunpack.c.l.b16 %v539
        %v576 = vunpack.c.l.b16 %v540
        %v577 = vunpack.c.l.b16 %v541
        %v578 = vunpack.c.l.b16 %v542
        %v579 = vunpack.c.l.b16 %v543
        %v580 = vunpack.c.l.b16 %v544
        %v581 = vunpack.c.l.b16 %v545
        %v582 = vpack.c.b16 %v567, %v566
        %v583 = vpack.c.b16 %v569, %v568
        %v584 = vpack.c.b16 %v571, %v570
        %v585 = vpack.c.b16 %v573, %v572
        %v586 = vpack.c.b16 %v575, %v574
        %v587 = vpack.c.b16 %v577, %v576
        %v588 = vpack.c.b16 %v579, %v578
        %v589 = vpack.c.b16 %v581, %v580
        %598 = vmatpush.bf16.msra.mxu0 %v589
        %599 = vmatpush.bf16.msra.mxu0 %v588
        %600 = vmatpush.bf16.msra.mxu0 %v587
        %601 = vmatpush.bf16.msra.mxu0 %v586
        %602 = vmatpush.bf16.msra.mxu0 %v585
        %603 = vmatpush.bf16.msra.mxu0 %v584
        %604 = vmatpush.bf16.msra.mxu0 %v583
        %605 = vmatpush.bf16.msra.mxu0 %v582
        %606 = vmatmul.bf16.gmra.mxu0 %v529
        %v607 = vpop.f32.mrf.mxu0
        %v608 = vadd.f32 %v548, %v607
        %v609 = vpop.f32.mrf.mxu0
        %610 = vdwg.mxu0
        %611 = vst [vmem:[%s345] sm:$0xff] %v608
        %s612 = sand.u32 %s186, 1
        %s613 = scalar_lea.sflag [#allocation4], %s612
        %s614 = sand.u32 %s186, 1
        %s615 = smul.addr %s614, 8
        %s616 = scalar_lea.vmem [#allocation10], %s615
        // Predicated region
        $region65: #{tpu_custom_call.1} parent=47 // pred_check
          %p617 = pneg %p196
        $region66: #{tpu_custom_call.1} parent=47 // pred_check_branch
          %619 = sbr.rel (%p617) target = $region68
        $region67: #{tpu_custom_call.1} parent=47 // pred_region
          %621 = vsyncadd %s613, 0
          %s622 = smul.addr %s26, 8
          %s623 = scalar_lea.hbm %s7, %s622
          %s625 = sshll.u32 %s616, 4
          %s626 = int_to_ptr.vmem [resolvable:$true] %s625
          %s627 = sshll.u32 %s623, 4
          %s628 = int_to_ptr.hbm [resolvable:$true] %s627
          %630 = dma.vmem_to_hbm [thread:$0]  %s626, 128, %s628, %s613
        $region68: #{tpu_custom_call.1} parent=47 // pred_fallthru
          _
      $region48: #{tpu_custom_call.1} parent=5 // pred_fallthru
        _
      %p631 = scmp.le.s32.totalorder 2, %s21
      // Predicated region
      $region69: #{tpu_custom_call.1} parent=5 // pred_check
        %p632 = pneg %p631
      $region70: #{tpu_custom_call.1} parent=5 // pred_check_branch
        %634 = sbr.rel (%p632) target = $region72
      $region71: #{tpu_custom_call.1} parent=5 // pred_region
        %s635 = ssub.s32 %s21, 2
        // Predicated region
        $region73: #{tpu_custom_call.1} parent=71 // pred_check
          %p636 = pneg %p202
        $region74: #{tpu_custom_call.1} parent=71 // pred_check_branch
          %638 = sbr.rel (%p636) target = $region76
        $region75: #{tpu_custom_call.1} parent=71 // pred_region
          %s639 = sand.u32 %s187, 1
          %s640 = scalar_lea.sflag [#allocation4], %s639
          %s641 = sand.u32 %s187, 1
          %s642 = smul.addr %s641, 8
          %s643 = scalar_lea.vmem [#allocation10], %s642
          %645 = dma.done %s640, 128
        $region76: #{tpu_custom_call.1} parent=71 // pred_fallthru
          _
      $region72: #{tpu_custom_call.1} parent=5 // pred_fallthru
        _
    $region6: #{tpu_custom_call.1} parent=1 // loop_footer
      %s25 = sadd.s32 1, %s21
    $region7: #{tpu_custom_call.1} parent=1 // loop_footer_branch
      %20 = sbr.rel target = $region3
    $region8: #{tpu_custom_call.1} parent=1 // loop_exit
      _
    %646 = vsyncpa [#allocation3], 1
    %s647 = scalar_lea.sflag [#allocation3], 1
    %648 = vsyncpa %s647, 1
    %649 = vsyncpa [#allocation6], 1
    %650 = vsyncpa [#allocation9], 1
    %651 = vsyncpa [#allocation4], 1
    %s652 = scalar_lea.sflag [#allocation4], 1
    %653 = vsyncpa %s652, 1

// kernel: tpu_custom_call.1
$region0: #{tpu_custom_call.1}
  #allocation0 [shape = 'u32[]', space=smem, size = 0x4, offset = 0x4, fixed_abs, tag = 'smem constant byte address 0x4 - core index']
  #allocation1 [shape = 'u32[72,128]{1,0:T(1,128)}', space=vmem, size = 0x9000, scoped, tag = 'internal scratch']
  %s0 = inlined_call_operand.hbm [shape: f32[16,128], index: 0, kind: input, shape index: {}]
  %s1 = inlined_call_operand.hbm [shape: bf16[128,128], index: 1, kind: input, shape index: {}]
  %s2 = inlined_call_operand.hbm [shape: bf16[128,128], index: 2, kind: input, shape index: {}]
  %s3 = inlined_call_operand.hbm [shape: bf16[128,128], index: 3, kind: input, shape index: {}]
  %s4 = inlined_call_operand.vmem [shape: f32[1,128], index: 4, kind: input, shape index: {}]
  %s5 = inlined_call_operand.vmem [shape: f32[1,128], index: 5, kind: input, shape index: {}]
  %s6 = inlined_call_operand.vmem [shape: f32[1,128], index: 6, kind: input, shape index: {}]
  %s7 = inlined_call_operand.hbm [shape: f32[16,128], index: 7, kind: output, shape index: {}]
  %s8 = sld [smem:[#allocation0]]
  $region77: #{tpu_custom_call.1} parent=0
    _
  %s10 = ssub.s32 1, %s8
  %s11 = scalar_select 0, %s10, %s8
  $region1: #{tpu_custom_call.1} parent=0
    #allocation2 [shape = 'u8[8192]{0}', space=vmem, size = 0x2000, scoped, tag = 'input window, operand 0']
    #allocation3 [shape = 's32[2]{0}', space=sflag, size = 0x8, scoped, tag = 'scoped memory for tpu_custom_call.1']
    #allocation4 [shape = 's32[2]{0}', space=sflag, size = 0x8, scoped, tag = 'scoped memory for tpu_custom_call.1']
    #allocation5 [shape = 'u8[32768]{0}', space=vmem, size = 0x8000, scoped, tag = 'input window, operand 1, single buffered']
    #allocation6 [shape = 's32[1]{0}', space=sflag, size = 0x4, scoped, tag = 'scoped memory for tpu_custom_call.1']
    #allocation7 [shape = 'u8[32768]{0}', space=vmem, size = 0x8000, scoped, tag = 'input window, operand 2, single buffered']
    #allocation8 [shape = 'u8[32768]{0}', space=vmem, size = 0x8000, scoped, tag = 'input window, operand 3, single buffered']
    #allocation9 [shape = 's32[1]{0}', space=sflag, size = 0x4, scoped, tag = 'scoped memory for tpu_custom_call.1']
    #allocation10 [shape = 'u8[8192]{0}', space=vmem, size = 0x2000, scoped, tag = 'output window, operand 0']
    %12 = vsyncpa [#allocation3], 0
    %s13 = scalar_lea.sflag [#allocation3], 1
    %14 = vsyncpa %s13, 0
    %15 = vsyncpa [#allocation6], 0
    %16 = vsyncpa [#allocation9], 0
    %17 = vsyncpa [#allocation4], 0
    %s18 = scalar_lea.sflag [#allocation4], 1
    %19 = vsyncpa %s18, 0
    loop: start=0, step=1, limit=4
    $region2: #{tpu_custom_call.1} parent=1 // loop_pre_header
      _
    $region3: #{tpu_custom_call.1} parent=1 // loop_header
      %s21 = sphi 0, %s25
      %p22 = scmp.ge.s32.totalorder %s21, 4
      %s31 = sphi 0, %s33
      %s34 = sphi 0, %s31
      %s35 = sphi 0, %s34
      %s51 = sphi 0, %s35
      %s55 = sphi 0, %s55
      %s57 = sphi 0, %s55
      %s58 = sphi 0, %s57
      %s72 = sphi 0, %s58
      %s76 = sphi 0, %s76
      %s78 = sphi 0, %s76
      %s79 = sphi 0, %s78
      %s93 = sphi 0, %s79
      %s97 = sphi 0, %s97
      %s99 = sphi 0, %s97
      %s100 = sphi 0, %s99
      %s114 = sphi 0, %s100
      %s118 = sphi 0, %s118
      %s120 = sphi 0, %s118
      %s121 = sphi 0, %s120
      %s135 = sphi 0, %s121
      %s139 = sphi 0, %s139
      %s141 = sphi 0, %s139
      %s142 = sphi 0, %s141
      %s156 = sphi 0, %s142
      %s160 = sphi 0, %s160
      %s162 = sphi 0, %s160
      %s163 = sphi 0, %s162
      %s177 = sphi 0, %s163
      %s183 = sphi 0, %s185
      %s186 = sphi 0, %s183
      %s187 = sphi 0, %s186
      %s203 = sphi 0, %s187
    $region4: #{tpu_custom_call.1} parent=1 // loop_header_branch
      %24 = sbr.rel (%p22) target = $region8
    $region5: #{tpu_custom_call.1} parent=1 // loop_body
      %s26 = ssub.s32 %s21, 1
      %s27 = ssub.s32 %s21, 2
      %s28 = sadd.s32 %s21, 1
      %s29 = ssub.s32 %s21, %s28
      %p30 = scmp.eq.s32.totalorder %s29, 0
      %s32 = sadd.s32 %s31, 1
      %s33 = scalar_select %p30, %s31, %s32
      %p36 = pneg %p30
      %p37 = scmp.eq.s32.totalorder %s21, 1
      %p38 = por %p36, %p37
      %p39 = scmp.ne.s32.totalorder %s31, %s34
      %p40 = scmp.eq.s32.totalorder %s21, 0
      %p41 = por %p39, %p40
      %p42 = scmp.ne.s32.totalorder %s31, %s34
      %p43 = scmp.eq.s32.totalorder %s26, 1
      %p44 = por %p42, %p43
      %p45 = scmp.ne.s32.totalorder %s34, %s35
      %p46 = scmp.eq.s32.totalorder %s26, 0
      %p47 = por %p45, %p46
      %p48 = scmp.ne.s32.totalorder %s34, %s35
      %p49 = scmp.eq.s32.totalorder %s27, 1
      %p50 = por %p48, %p49
      %p52 = scmp.ne.s32.totalorder %s35, %s51
      %p53 = scmp.eq.s32.totalorder %s27, 0
      %p54 = por %p52, %p53
      %s56 = sadd.s32 %s55, 1
      %p59 = scmp.eq.s32.totalorder %s21, 1
      %p60 = scmp.ne.s32.totalorder %s55, %s57
      %p61 = scmp.eq.s32.totalorder %s21, 0
      %p62 = por %p60, %p61
      %p63 = scmp.ne.s32.totalorder %s55, %s57
      %p64 = scmp.eq.s32.totalorder %s26, 1
      %p65 = por %p63, %p64
      %p66 = scmp.ne.s32.totalorder %s57, %s58
      %p67 = scmp.eq.s32.totalorder %s26, 0
      %p68 = por %p66, %p67
      %p69 = scmp.ne.s32.totalorder %s57, %s58
      %p70 = scmp.eq.s32.totalorder %s27, 1
      %p71 = por %p69, %p70
      %p73 = scmp.ne.s32.totalorder %s58, %s72
      %p74 = scmp.eq.s32.totalorder %s27, 0
      %p75 = por %p73, %p74
      %s77 = sadd.s32 %s76, 1
      %p80 = scmp.eq.s32.totalorder %s21, 1
      %p81 = scmp.ne.s32.totalorder %s76, %s78
      %p82 = scmp.eq.s32.totalorder %s21, 0
      %p83 = por %p81, %p82
      %p84 = scmp.ne.s32.totalorder %s76, %s78
      %p85 = scmp.eq.s32.totalorder %s26, 1
      %p86 = por %p84, %p85
      %p87 = scmp.ne.s32.totalorder %s78, %s79
      %p88 = scmp.eq.s32.totalorder %s26, 0
      %p89 = por %p87, %p88
      %p90 = scmp.ne.s32.totalorder %s78, %s79
      %p91 = scmp.eq.s32.totalorder %s27, 1
      %p92 = por %p90, %p91
      %p94 = scmp.ne.s32.totalorder %s79, %s93
      %p95 = scmp.eq.s32.totalorder %s27, 0
      %p96 = por %p94, %p95
      %s98 = sadd.s32 %s97, 1
      %p101 = scmp.eq.s32.totalorder %s21, 1
      %p102 = scmp.ne.s32.totalorder %s97, %s99
      %p103 = scmp.eq.s32.totalorder %s21, 0
      %p104 = por %p102, %p103
      %p105 = scmp.ne.s32.totalorder %s97, %s99
      %p106 = scmp.eq.s32.totalorder %s26, 1
      %p107 = por %p105, %p106
      %p108 = scmp.ne.s32.totalorder %s99, %s100
      %p109 = scmp.eq.s32.totalorder %s26, 0
      %p110 = por %p108, %p109
      %p111 = scmp.ne.s32.totalorder %s99, %s100
      %p112 = scmp.eq.s32.totalorder %s27, 1
      %p113 = por %p111, %p112
      %p115 = scmp.ne.s32.totalorder %s100, %s114
      %p116 = scmp.eq.s32.totalorder %s27, 0
      %p117 = por %p115, %p116
      %s119 = sadd.s32 %s118, 1
      %p122 = scmp.eq.s32.totalorder %s21, 1
      %p123 = scmp.ne.s32.totalorder %s118, %s120
      %p124 = scmp.eq.s32.totalorder %s21, 0
      %p125 = por %p123, %p124
      %p126 = scmp.ne.s32.totalorder %s118, %s120
      %p127 = scmp.eq.s32.totalorder %s26, 1
      %p128 = por %p126, %p127
      %p129 = scmp.ne.s32.totalorder %s120, %s121
      %p130 = scmp.eq.s32.totalorder %s26, 0
      %p131 = por %p129, %p130
      %p132 = scmp.ne.s32.totalorder %s120, %s121
      %p133 = scmp.eq.s32.totalorder %s27, 1
      %p134 = por %p132, %p133
      %p136 = scmp.ne.s32.totalorder %s121, %s135
      %p137 = scmp.eq.s32.totalorder %s27, 0
      %p138 = por %p136, %p137
      %s140 = sadd.s32 %s139, 1
      %p143 = scmp.eq.s32.totalorder %s21, 1
      %p144 = scmp.ne.s32.totalorder %s139, %s141
      %p145 = scmp.eq.s32.totalorder %s21, 0
      %p146 = por %p144, %p145
      %p147 = scmp.ne.s32.totalorder %s139, %s141
      %p148 = scmp.eq.s32.totalorder %s26, 1
      %p149 = por %p147, %p148
      %p150 = scmp.ne.s32.totalorder %s141, %s142
      %p151 = scmp.eq.s32.totalorder %s26, 0
      %p152 = por %p150, %p151
      %p153 = scmp.ne.s32.totalorder %s141, %s142
      %p154 = scmp.eq.s32.totalorder %s27, 1
      %p155 = por %p153, %p154
      %p157 = scmp.ne.s32.totalorder %s142, %s156
      %p158 = scmp.eq.s32.totalorder %s27, 0
      %p159 = por %p157, %p158
      %s161 = sadd.s32 %s160, 1
      %p164 = scmp.eq.s32.totalorder %s21, 1
      %p165 = scmp.ne.s32.totalorder %s160, %s162
      %p166 = scmp.eq.s32.totalorder %s21, 0
      %p167 = por %p165, %p166
      %p168 = scmp.ne.s32.totalorder %s160, %s162
      %p169 = scmp.eq.s32.totalorder %s26, 1
      %p170 = por %p168, %p169
      %p171 = scmp.ne.s32.totalorder %s162, %s163
      %p172 = scmp.eq.s32.totalorder %s26, 0
      %p173 = por %p171, %p172
      %p174 = scmp.ne.s32.totalorder %s162, %s163
      %p175 = scmp.eq.s32.totalorder %s27, 1
      %p176 = por %p174, %p175
      %p178 = scmp.ne.s32.totalorder %s163, %s177
      %p179 = scmp.eq.s32.totalorder %s27, 0
      %p180 = por %p178, %p179
      %s181 = ssub.s32 %s21, %s28
      %p182 = scmp.eq.s32.totalorder %s181, 0
      %s184 = sadd.s32 %s183, 1
      %s185 = scalar_select %p182, %s183, %s184
      %p188 = pneg %p182
      %p189 = scmp.eq.s32.totalorder %s21, 1
      %p190 = por %p188, %p189
      %p191 = scmp.ne.s32.totalorder %s183, %s186
      %p192 = scmp.eq.s32.totalorder %s21, 0
      %p193 = por %p191, %p192
      %p194 = scmp.ne.s32.totalorder %s183, %s186
      %p195 = scmp.eq.s32.totalorder %s26, 1
      %p196 = por %p194, %p195
      %p197 = scmp.ne.s32.totalorder %s186, %s187
      %p198 = scmp.eq.s32.totalorder %s26, 0
      %p199 = por %p197, %p198
      %p200 = scmp.ne.s32.totalorder %s186, %s187
      %p201 = scmp.eq.s32.totalorder %s27, 1
      %p202 = por %p200, %p201
      %p204 = scmp.ne.s32.totalorder %s187, %s203
      %p205 = scmp.eq.s32.totalorder %s27, 0
      %p206 = por %p204, %p205
      %p207 = scmp.le.s32.totalorder 1, %s21
      %p208 = scmp.lt.s32.totalorder %s21, 3
      %p209 = pnand %p207, %p208
      %p210 = pneg %p209
      // Predicated region
      $region9: #{tpu_custom_call.1} parent=5 // pred_check
        _
      $region10: #{tpu_custom_call.1} parent=5 // pred_check_branch
        %212 = sbr.rel (%p209) target = $region12
      $region11: #{tpu_custom_call.1} parent=5 // pred_region
        %s213 = ssub.s32 %s21, 1
        // Predicated region
        $region13: #{tpu_custom_call.1} parent=11 // pred_check
          %p214 = pneg %p68
        $region14: #{tpu_custom_call.1} parent=11 // pred_check_branch
          %216 = sbr.rel (%p214) target = $region16
        $region15: #{tpu_custom_call.1} parent=11 // pred_region
          %218 = vsyncadd [#allocation6], 0
          %s219 = sshll.u32 %s1, 4
          %s220 = int_to_ptr.hbm [resolvable:$true] %s219
          %s221 = sshll.u32 [#allocation5], 4
          %s222 = int_to_ptr.vmem [resolvable:$true] %s221
          %227 = dma.hbm_to_vmem [thread:$0]  %s220, 1024, %s222, [#allocation6], 64, 64, 4
        $region16: #{tpu_custom_call.1} parent=11 // pred_fallthru
          _
        // Predicated region
        $region17: #{tpu_custom_call.1} parent=11 // pred_check
          %p228 = pneg %p89
        $region18: #{tpu_custom_call.1} parent=11 // pred_check_branch
          %230 = sbr.rel (%p228) target = $region20
        $region19: #{tpu_custom_call.1} parent=11 // pred_region
          %232 = vsyncadd [#allocation6], 0
          %s233 = sshll.u32 %s2, 4
          %s234 = int_to_ptr.hbm [resolvable:$true] %s233
          %s235 = sshll.u32 [#allocation7], 4
          %s236 = int_to_ptr.vmem [resolvable:$true] %s235
          %241 = dma.hbm_to_vmem [thread:$0]  %s234, 1024, %s236, [#allocation6], 64, 64, 4
        $region20: #{tpu_custom_call.1} parent=11 // pred_fallthru
          _
        // Predicated region
        $region21: #{tpu_custom_call.1} parent=11 // pred_check
          %p242 = pneg %p110
        $region22: #{tpu_custom_call.1} parent=11 // pred_check_branch
          %244 = sbr.rel (%p242) target = $region24
        $region23: #{tpu_custom_call.1} parent=11 // pred_region
          %246 = vsyncadd [#allocation9], 0
          %s247 = sshll.u32 %s3, 4
          %s248 = int_to_ptr.hbm [resolvable:$true] %s247
          %s249 = sshll.u32 [#allocation8], 4
          %s250 = int_to_ptr.vmem [resolvable:$true] %s249
          %255 = dma.hbm_to_vmem [thread:$0]  %s248, 1024, %s250, [#allocation9], 64, 64, 4
        $region24: #{tpu_custom_call.1} parent=11 // pred_fallthru
          _
        // Predicated region
        $region25: #{tpu_custom_call.1} parent=11 // pred_check
          %p256 = pneg %p131
        $region26: #{tpu_custom_call.1} parent=11 // pred_check_branch
          %258 = sbr.rel (%p256) target = $region28
        $region27: #{tpu_custom_call.1} parent=11 // pred_region
          _
        $region28: #{tpu_custom_call.1} parent=11 // pred_fallthru
          _
        // Predicated region
        $region29: #{tpu_custom_call.1} parent=11 // pred_check
          %p259 = pneg %p152
        $region30: #{tpu_custom_call.1} parent=11 // pred_check_branch
          %261 = sbr.rel (%p259) target = $region32
        $region31: #{tpu_custom_call.1} parent=11 // pred_region
          _
        $region32: #{tpu_custom_call.1} parent=11 // pred_fallthru
          _
        // Predicated region
        $region33: #{tpu_custom_call.1} parent=11 // pred_check
          %p262 = pneg %p173
        $region34: #{tpu_custom_call.1} parent=11 // pred_check_branch
          %264 = sbr.rel (%p262) target = $region36
        $region35: #{tpu_custom_call.1} parent=11 // pred_region
          _
        $region36: #{tpu_custom_call.1} parent=11 // pred_fallthru
          _
      $region12: #{tpu_custom_call.1} parent=5 // pred_fallthru
        _
      %p265 = scmp.lt.s32.totalorder %s21, 2
      // Predicated region
      $region37: #{tpu_custom_call.1} parent=5 // pred_check
        %p266 = pneg %p265
      $region38: #{tpu_custom_call.1} parent=5 // pred_check_branch
        %268 = sbr.rel (%p266) target = $region40
      $region39: #{tpu_custom_call.1} parent=5 // pred_region
        // Predicated region
        $region41: #{tpu_custom_call.1} parent=39 // pred_check
          %p269 = pneg %p41
        $region42: #{tpu_custom_call.1} parent=39 // pred_check_branch
          %271 = sbr.rel (%p269) target = $region44
        $region43: #{tpu_custom_call.1} parent=39 // pred_region
          %s272 = sand.u32 %s31, 1
          %s273 = scalar_lea.sflag [#allocation3], %s272
          %s274 = sand.u32 %s31, 1
          %s275 = smul.addr %s274, 8
          %s276 = scalar_lea.vmem [#allocation2], %s275
          %278 = vsyncadd %s273, 0
          %s279 = smul.addr %s21, 8
          %s280 = scalar_lea.hbm %s0, %s279
          %s282 = sshll.u32 %s280, 4
          %s283 = int_to_ptr.hbm [resolvable:$true] %s282
          %s284 = sshll.u32 %s276, 4
          %s285 = int_to_ptr.vmem [resolvable:$true] %s284
          %287 = dma.hbm_to_vmem [thread:$0]  %s283, 128, %s285, %s273
        $region44: #{tpu_custom_call.1} parent=39 // pred_fallthru
          _
      $region40: #{tpu_custom_call.1} parent=5 // pred_fallthru
        _
      %p288 = scmp.le.s32.totalorder 1, %s21
      %p289 = scmp.lt.s32.totalorder %s21, 3
      %p290 = pnand %p288, %p289
      %p291 = pneg %p290
      // Predicated region
      $region45: #{tpu_custom_call.1} parent=5 // pred_check
        _
      $region46: #{tpu_custom_call.1} parent=5 // pred_check_branch
        %293 = sbr.rel (%p290) target = $region48
      $region47: #{tpu_custom_call.1} parent=5 // pred_region
        %s294 = ssub.s32 %s21, 1
        %s295 = sand.u32 %s34, 1
        %s296 = scalar_lea.sflag [#allocation3], %s295
        %s297 = sand.u32 %s34, 1
        %s298 = smul.addr %s297, 8
        %s299 = scalar_lea.vmem [#allocation2], %s298
        // Predicated region
        $region49: #{tpu_custom_call.1} parent=47 // pred_check
          %p300 = pneg %p47
        $region50: #{tpu_custom_call.1} parent=47 // pred_check_branch
          %302 = sbr.rel (%p300) target = $region52
        $region51: #{tpu_custom_call.1} parent=47 // pred_region
          %304 = dma.done %s296, 128
        $region52: #{tpu_custom_call.1} parent=47 // pred_fallthru
          _
        // Predicated region
        $region53: #{tpu_custom_call.1} parent=47 // pred_check
          %p305 = pneg %p68
        $region54: #{tpu_custom_call.1} parent=47 // pred_check_branch
          %307 = sbr.rel (%p305) target = $region56
        $region55: #{tpu_custom_call.1} parent=47 // pred_region
          %309 = dma.done [#allocation6], 1024
        $region56: #{tpu_custom_call.1} parent=47 // pred_fallthru
          _
        // Predicated region
        $region57: #{tpu_custom_call.1} parent=47 // pred_check
          %p310 = pneg %p89
        $region58: #{tpu_custom_call.1} parent=47 // pred_check_branch
          %312 = sbr.rel (%p310) target = $region60
        $region59: #{tpu_custom_call.1} parent=47 // pred_region
          %314 = dma.done [#allocation6], 1024
        $region60: #{tpu_custom_call.1} parent=47 // pred_fallthru
          _
        // Predicated region
        $region61: #{tpu_custom_call.1} parent=47 // pred_check
          %p315 = pneg %p110
        $region62: #{tpu_custom_call.1} parent=47 // pred_check_branch
          %317 = sbr.rel (%p315) target = $region64
        $region63: #{tpu_custom_call.1} parent=47 // pred_region
          %319 = dma.done [#allocation9], 1024
        $region64: #{tpu_custom_call.1} parent=47 // pred_fallthru
          _
        %s320 = sand.u32 %s34, 1
        %s321 = scalar_lea.sflag [#allocation3], %s320
        %s322 = sand.u32 %s34, 1
        %s323 = smul.addr %s322, 8
        %s324 = scalar_lea.vmem [#allocation2], %s323
        %p325 = pneg %p47
        %p326 = pneg %p44
        %p327 = pneg %p68
        %p328 = pneg %p65
        %p329 = pneg %p89
        %p330 = pneg %p86
        %p331 = pneg %p110
        %p332 = pneg %p107
        %p333 = pneg %p131
        %p334 = pneg %p128
        %p335 = pneg %p152
        %p336 = pneg %p149
        %p337 = pneg %p173
        %p338 = pneg %p170
        %p339 = pneg %p199
        %p340 = pneg %p196
        %s341 = sand.u32 %s186, 1
        %s342 = scalar_lea.sflag [#allocation4], %s341
        %s343 = sand.u32 %s186, 1
        %s344 = smul.addr %s343, 8
        %s345 = scalar_lea.vmem [#allocation10], %s344
        %v346 = vld [vmem:[%s299] sm:$0xff]
        %v347 = vpack.c.bf16 %v346, %v346
        %v348 = vld [vmem:[#allocation5] sm:$0xf]
        %v349 = vld [vmem:[#allocation5 + $0x4] sm:$0xf]
        %v350 = vld [vmem:[#allocation5 + $0x8] sm:$0xf]
        %v351 = vld [vmem:[#allocation5 + $0xc] sm:$0xf]
        %v352 = vld [vmem:[#allocation5 + $0x10] sm:$0xf]
        %v353 = vld [vmem:[#allocation5 + $0x14] sm:$0xf]
        %v354 = vld [vmem:[#allocation5 + $0x18] sm:$0xf]
        %v355 = vld [vmem:[#allocation5 + $0x1c] sm:$0xf]
        %v356 = vld [vmem:[#allocation5 + $0x20] sm:$0xf]
        %v357 = vld [vmem:[#allocation5 + $0x24] sm:$0xf]
        %v358 = vld [vmem:[#allocation5 + $0x28] sm:$0xf]
        %v359 = vld [vmem:[#allocation5 + $0x2c] sm:$0xf]
        %v360 = vld [vmem:[#allocation5 + $0x30] sm:$0xf]
        %v361 = vld [vmem:[#allocation5 + $0x34] sm:$0xf]
        %v362 = vld [vmem:[#allocation5 + $0x38] sm:$0xf]
        %v363 = vld [vmem:[#allocation5 + $0x3c] sm:$0xf]
        %v364 = vld [vmem:[%s4] sm:$0x1]
        %v366 = vperm.slane %v364, 0
        %v384 = vunpack.c.l.b16 %v348
        %v385 = vunpack.c.l.b16 %v349
        %v386 = vunpack.c.l.b16 %v350
        %v387 = vunpack.c.l.b16 %v351
        %v388 = vunpack.c.l.b16 %v352
        %v389 = vunpack.c.l.b16 %v353
        %v390 = vunpack.c.l.b16 %v354
        %v391 = vunpack.c.l.b16 %v355
        %v392 = vunpack.c.l.b16 %v356
        %v393 = vunpack.c.l.b16 %v357
        %v394 = vunpack.c.l.b16 %v358
        %v395 = vunpack.c.l.b16 %v359
        %v396 = vunpack.c.l.b16 %v360
        %v397 = vunpack.c.l.b16 %v361
        %v398 = vunpack.c.l.b16 %v362
        %v399 = vunpack.c.l.b16 %v363
        %v400 = vpack.c.b16 %v385, %v384
        %v401 = vpack.c.b16 %v387, %v386
        %v402 = vpack.c.b16 %v389, %v388
        %v403 = vpack.c.b16 %v391, %v390
        %v404 = vpack.c.b16 %v393, %v392
        %v405 = vpack.c.b16 %v395, %v394
        %v406 = vpack.c.b16 %v397, %v396
        %v407 = vpack.c.b16 %v399, %v398
        %416 = vmatpush.bf16.msra.mxu0 %v407
        %417 = vmatpush.bf16.msra.mxu0 %v406
        %418 = vmatpush.bf16.msra.mxu0 %v405
        %419 = vmatpush.bf16.msra.mxu0 %v404
        %420 = vmatpush.bf16.msra.mxu0 %v403
        %421 = vmatpush.bf16.msra.mxu0 %v402
        %422 = vmatpush.bf16.msra.mxu0 %v401
        %423 = vmatpush.bf16.msra.mxu0 %v400
        %424 = vmatmul.bf16.gmra.mxu0 %v347
        %v425 = vpop.f32.mrf.mxu0
        %v426 = vadd.f32 %v366, %v425
        %v427 = vpop.f32.mrf.mxu0
        %428 = vdwg.mxu0
        %v429 = vmul.f32 %v426, 0.5
        %v430 = vmul.f32 %v426, 0.044715
        %v431 = vmul.f32 %v430, %v426
        %v432 = vmul.f32 %v431, %v426
        %v433 = vadd.f32 %v426, %v432
        %v434 = vmul.f32 %v433, 0.7978846
        %v435 = vtanh.pop %v434
        %v436 = vadd.f32 %v435, 1.0
        %v437 = vmul.f32 %v429, %v436
        %v438 = vpack.c.bf16 %v437, %v437
        %v439 = vld [vmem:[#allocation7] sm:$0xf]
        %v440 = vld [vmem:[#allocation7 + $0x4] sm:$0xf]
        %v441 = vld [vmem:[#allocation7 + $0x8] sm:$0xf]
        %v442 = vld [vmem:[#allocation7 + $0xc] sm:$0xf]
        %v443 = vld [vmem:[#allocation7 + $0x10] sm:$0xf]
        %v444 = vld [vmem:[#allocation7 + $0x14] sm:$0xf]
        %v445 = vld [vmem:[#allocation7 + $0x18] sm:$0xf]
        %v446 = vld [vmem:[#allocation7 + $0x1c] sm:$0xf]
        %v447 = vld [vmem:[#allocation7 + $0x20] sm:$0xf]
        %v448 = vld [vmem:[#allocation7 + $0x24] sm:$0xf]
        %v449 = vld [vmem:[#allocation7 + $0x28] sm:$0xf]
        %v450 = vld [vmem:[#allocation7 + $0x2c] sm:$0xf]
        %v451 = vld [vmem:[#allocation7 + $0x30] sm:$0xf]
        %v452 = vld [vmem:[#allocation7 + $0x34] sm:$0xf]
        %v453 = vld [vmem:[#allocation7 + $0x38] sm:$0xf]
        %v454 = vld [vmem:[#allocation7 + $0x3c] sm:$0xf]
        %v455 = vld [vmem:[%s5] sm:$0x1]
        %v457 = vperm.slane %v455, 0
        %v475 = vunpack.c.l.b16 %v439
        %v476 = vunpack.c.l.b16 %v440
        %v477 = vunpack.c.l.b16 %v441
        %v478 = vunpack.c.l.b16 %v442
        %v479 = vunpack.c.l.b16 %v443
        %v480 = vunpack.c.l.b16 %v444
        %v481 = vunpack.c.l.b16 %v445
        %v482 = vunpack.c.l.b16 %v446
        %v483 = vunpack.c.l.b16 %v447
        %v484 = vunpack.c.l.b16 %v448
        %v485 = vunpack.c.l.b16 %v449
        %v486 = vunpack.c.l.b16 %v450
        %v487 = vunpack.c.l.b16 %v451
        %v488 = vunpack.c.l.b16 %v452
        %v489 = vunpack.c.l.b16 %v453
        %v490 = vunpack.c.l.b16 %v454
        %v491 = vpack.c.b16 %v476, %v475
        %v492 = vpack.c.b16 %v478, %v477
        %v493 = vpack.c.b16 %v480, %v479
        %v494 = vpack.c.b16 %v482, %v481
        %v495 = vpack.c.b16 %v484, %v483
        %v496 = vpack.c.b16 %v486, %v485
        %v497 = vpack.c.b16 %v488, %v487
        %v498 = vpack.c.b16 %v490, %v489
        %507 = vmatpush.bf16.msra.mxu0 %v498
        %508 = vmatpush.bf16.msra.mxu0 %v497
        %509 = vmatpush.bf16.msra.mxu0 %v496
        %510 = vmatpush.bf16.msra.mxu0 %v495
        %511 = vmatpush.bf16.msra.mxu0 %v494
        %512 = vmatpush.bf16.msra.mxu0 %v493
        %513 = vmatpush.bf16.msra.mxu0 %v492
        %514 = vmatpush.bf16.msra.mxu0 %v491
        %515 = vmatmul.bf16.gmra.mxu0 %v438
        %v516 = vpop.f32.mrf.mxu0
        %v517 = vadd.f32 %v457, %v516
        %v518 = vpop.f32.mrf.mxu0
        %519 = vdwg.mxu0
        %v520 = vmul.f32 %v517, 0.5
        %v521 = vmul.f32 %v517, 0.044715
        %v522 = vmul.f32 %v521, %v517
        %v523 = vmul.f32 %v522, %v517
        %v524 = vadd.f32 %v517, %v523
        %v525 = vmul.f32 %v524, 0.7978846
        %v526 = vtanh.pop %v525
        %v527 = vadd.f32 %v526, 1.0
        %v528 = vmul.f32 %v520, %v527
        %v529 = vpack.c.bf16 %v528, %v528
        %v530 = vld [vmem:[#allocation8] sm:$0xf]
        %v531 = vld [vmem:[#allocation8 + $0x4] sm:$0xf]
        %v532 = vld [vmem:[#allocation8 + $0x8] sm:$0xf]
        %v533 = vld [vmem:[#allocation8 + $0xc] sm:$0xf]
        %v534 = vld [vmem:[#allocation8 + $0x10] sm:$0xf]
        %v535 = vld [vmem:[#allocation8 + $0x14] sm:$0xf]
        %v536 = vld [vmem:[#allocation8 + $0x18] sm:$0xf]
        %v537 = vld [vmem:[#allocation8 + $0x1c] sm:$0xf]
        %v538 = vld [vmem:[#allocation8 + $0x20] sm:$0xf]
        %v539 = vld [vmem:[#allocation8 + $0x24] sm:$0xf]
        %v540 = vld [vmem:[#allocation8 + $0x28] sm:$0xf]
        %v541 = vld [vmem:[#allocation8 + $0x2c] sm:$0xf]
        %v542 = vld [vmem:[#allocation8 + $0x30] sm:$0xf]
        %v543 = vld [vmem:[#allocation8 + $0x34] sm:$0xf]
        %v544 = vld [vmem:[#allocation8 + $0x38] sm:$0xf]
        %v545 = vld [vmem:[#allocation8 + $0x3c] sm:$0xf]
        %v546 = vld [vmem:[%s6] sm:$0x1]
        %v548 = vperm.slane %v546, 0
        %v566 = vunpack.c.l.b16 %v530
        %v567 = vunpack.c.l.b16 %v531
        %v568 = vunpack.c.l.b16 %v532
        %v569 = vunpack.c.l.b16 %v533
        %v570 = vunpack.c.l.b16 %v534
        %v571 = vunpack.c.l.b16 %v535
        %v572 = vunpack.c.l.b16 %v536
        %v573 = vunpack.c.l.b16 %v537
        %v574 = vunpack.c.l.b16 %v538
        %v575 = vunpack.c.l.b16 %v539
        %v576 = vunpack.c.l.b16 %v540
        %v577 = vunpack.c.l.b16 %v541
        %v578 = vunpack.c.l.b16 %v542
        %v579 = vunpack.c.l.b16 %v543
        %v580 = vunpack.c.l.b16 %v544
        %v581 = vunpack.c.l.b16 %v545
        %v582 = vpack.c.b16 %v567, %v566
        %v583 = vpack.c.b16 %v569, %v568
        %v584 = vpack.c.b16 %v571, %v570
        %v585 = vpack.c.b16 %v573, %v572
        %v586 = vpack.c.b16 %v575, %v574
        %v587 = vpack.c.b16 %v577, %v576
        %v588 = vpack.c.b16 %v579, %v578
        %v589 = vpack.c.b16 %v581, %v580
        %598 = vmatpush.bf16.msra.mxu0 %v589
        %599 = vmatpush.bf16.msra.mxu0 %v588
        %600 = vmatpush.bf16.msra.mxu0 %v587
        %601 = vmatpush.bf16.msra.mxu0 %v586
        %602 = vmatpush.bf16.msra.mxu0 %v585
        %603 = vmatpush.bf16.msra.mxu0 %v584
        %604 = vmatpush.bf16.msra.mxu0 %v583
        %605 = vmatpush.bf16.msra.mxu0 %v582
        %606 = vmatmul.bf16.gmra.mxu0 %v529
        %v607 = vpop.f32.mrf.mxu0
        %v608 = vadd.f32 %v548, %v607
        %v609 = vpop.f32.mrf.mxu0
        %610 = vdwg.mxu0
        %611 = vst [vmem:[%s345] sm:$0xff] %v608
        %s612 = sand.u32 %s186, 1
        %s613 = scalar_lea.sflag [#allocation4], %s612
        %s614 = sand.u32 %s186, 1
        %s615 = smul.addr %s614, 8
        %s616 = scalar_lea.vmem [#allocation10], %s615
        // Predicated region
        $region65: #{tpu_custom_call.1} parent=47 // pred_check
          %p617 = pneg %p196
        $region66: #{tpu_custom_call.1} parent=47 // pred_check_branch
          %619 = sbr.rel (%p617) target = $region68
        $region67: #{tpu_custom_call.1} parent=47 // pred_region
          %621 = vsyncadd %s613, 0
          %s622 = smul.addr %s26, 8
          %s623 = scalar_lea.hbm %s7, %s622
          %s625 = sshll.u32 %s616, 4
          %s626 = int_to_ptr.vmem [resolvable:$true] %s625
          %s627 = sshll.u32 %s623, 4
          %s628 = int_to_ptr.hbm [resolvable:$true] %s627
          %630 = dma.vmem_to_hbm [thread:$0]  %s626, 128, %s628, %s613
        $region68: #{tpu_custom_call.1} parent=47 // pred_fallthru
          _
      $region48: #{tpu_custom_call.1} parent=5 // pred_fallthru
        _
      %p631 = scmp.le.s32.totalorder 2, %s21
      // Predicated region
      $region69: #{tpu_custom_call.1} parent=5 // pred_check
        %p632 = pneg %p631
      $region70: #{tpu_custom_call.1} parent=5 // pred_check_branch
        %634 = sbr.rel (%p632) target = $region72
      $region71: #{tpu_custom_call.1} parent=5 // pred_region
        %s635 = ssub.s32 %s21, 2
        // Predicated region
        $region73: #{tpu_custom_call.1} parent=71 // pred_check
          %p636 = pneg %p202
        $region74: #{tpu_custom_call.1} parent=71 // pred_check_branch
          %638 = sbr.rel (%p636) target = $region76
        $region75: #{tpu_custom_call.1} parent=71 // pred_region
          %s639 = sand.u32 %s187, 1
          %s640 = scalar_lea.sflag [#allocation4], %s639
          %s641 = sand.u32 %s187, 1
          %s642 = smul.addr %s641, 8
          %s643 = scalar_lea.vmem [#allocation10], %s642
          %645 = dma.done %s640, 128
        $region76: #{tpu_custom_call.1} parent=71 // pred_fallthru
          _
      $region72: #{tpu_custom_call.1} parent=5 // pred_fallthru
        _
    $region6: #{tpu_custom_call.1} parent=1 // loop_footer
      %s25 = sadd.s32 1, %s21
    $region7: #{tpu_custom_call.1} parent=1 // loop_footer_branch
      %20 = sbr.rel target = $region3
    $region8: #{tpu_custom_call.1} parent=1 // loop_exit
      _
    %646 = vsyncpa [#allocation3], 1
    %s647 = scalar_lea.sflag [#allocation3], 1
    %648 = vsyncpa %s647, 1
    %649 = vsyncpa [#allocation6], 1
    %650 = vsyncpa [#allocation9], 1
    %651 = vsyncpa [#allocation4], 1
    %s652 = scalar_lea.sflag [#allocation4], 1
    %653 = vsyncpa %s652, 1

</llo_original>
